<compile_context>
chip_gen: v7x
topology: tpu7x:2x2x1
jax: 0.10.0
libtpu: 0.0.40
codegen_flags: <defaults>
</compile_context>

<pallas_src>
import functools

import numpy as np
import jax
import jax.numpy as jnp
from jax import lax
from jax.experimental import pallas as pl
from jax.experimental.pallas import tpu as pltpu

EPS = 1e-5


# ----------------------------------------------------------------------------------
# kernel helpers
# ----------------------------------------------------------------------------------
def _conv3x3_folded(x32, xc, w_ref, up_mask, down_mask):
    """3x3 'same' conv in the W-folded layout; H-halo via sublane rolls + masks.

    x32     : (N*H, L_in) fp32  activation slab (source of the rolled row taps)
    xc      : (N*H, L_in)       x32 pre-cast to the MXU compute dtype (center tap)
    w_ref   : (3, L_in, L_out)  block-Toeplitz weights (kw taps + W padding folded in)
    up_mask / down_mask : (N*H, 1) bool — rows whose rolled tap wrapped across an
        image boundary (h == 0 / h == H-1) and must read zero padding instead.
    """
    nh = x32.shape[0]
    cdt = w_ref.dtype
    # pltpu.roll matches jnp.roll semantics: out[r] = x[(r - shift) % nh]
    up = jnp.where(up_mask, 0.0, pltpu.roll(x32, shift=1, axis=0)).astype(cdt)
    down = jnp.where(down_mask, 0.0, pltpu.roll(x32, shift=nh - 1, axis=0)).astype(cdt)
    # TODO(synk): on v5e, stack the three taps along K into one (N*H, 3*L_in) matmul
    # to cut MRF drain/pop overhead to a single MXU push per conv.
    acc = jnp.dot(up, w_ref[0], preferred_element_type=jnp.float32)
    acc = acc + jnp.dot(xc, w_ref[1], preferred_element_type=jnp.float32)
    acc = acc + jnp.dot(down, w_ref[2], preferred_element_type=jnp.float32)
    return acc                                            # (N*H, L_out) fp32


def _batchnorm_folded(y2d, gb_ref, s_ref, st_ref, inv_count):
    """Training-mode BN over (N,H,W), biased variance, in the W-folded layout.

    One fold matmul (sum & sum-of-squares stacked as (2, W*C)) and one broadcast
    matmul (scale & shift stacked as (2, C)); the epilogue is a single FMA.
    gb_ref: (2, C) fp32 with gamma in row 0, beta in row 1.
    s_ref : (W*C, C) lane->channel fold; st_ref: (C, W*C) channel->lane broadcast.
    """
    col_sum = jnp.sum(y2d, axis=0, keepdims=True)                         # (1, W*C)
    col_sq = jnp.sum(y2d * y2d, axis=0, keepdims=True)                    # (1, W*C)
    stats_c = jnp.dot(jnp.concatenate([col_sum, col_sq], axis=0), s_ref[...],
                      preferred_element_type=jnp.float32) * inv_count     # (2, C)
    mean_c = stats_c[0:1, :]
    var_c = jnp.maximum(stats_c[1:2, :] - mean_c * mean_c, 0.0)           # biased var
    scale_c = lax.rsqrt(var_c + EPS) * gb_ref[0:1, :]                     # gamma / std
    shift_c = gb_ref[1:2, :] - scale_c * mean_c                           # beta - scale*mean
    coef = jnp.dot(jnp.concatenate([scale_c, shift_c], axis=0), st_ref[...],
                   preferred_element_type=jnp.float32)                    # (2, W*C)
    return y2d * coef[0:1, :] + coef[1:2, :]


# ----------------------------------------------------------------------------------
# the kernel
# ----------------------------------------------------------------------------------
def resblock_kernel(x_ref, w1_ref, w2_ref, ws_ref, gb1_ref, gb2_ref, gbs_ref,
                    s_ref, st_ref, out_ref, *, h_dim):
    # x_ref  : (N*H, W*Cin) fp32     W-folded input slab
    # w1_ref : (3, W*Cin, W*Cout)    conv1 block-Toeplitz weights (compute dtype)
    # w2_ref : (3, W*Cout, W*Cout)   conv2 block-Toeplitz weights (compute dtype)
    # ws_ref : (W*Cin, W*Cout)       shortcut 1x1 block-diagonal weight (compute dtype)
    # gb*_ref: (2, Cout) fp32        BN gamma (row 0) / beta (row 1)
    # s_ref  : (W*Cout, Cout), st_ref: (Cout, W*Cout)  fp32 lane<->channel matrices
    # out_ref: (N*H, W*Cout) fp32    lane-dense output slab
    nh = x_ref.shape[0]
    w_len = s_ref.shape[0] // s_ref.shape[1]
    inv_count = 1.0 / float(nh * w_len)

    # image-row boundary masks: row r of the slab is image row r % H
    h_ids = lax.broadcasted_iota(jnp.int32, (nh, 1), 0) % h_dim
    up_mask = h_ids == 0
    down_mask = h_ids == h_dim - 1

    x32 = x_ref[...]
    xc = x32.astype(w1_ref.dtype)

    # ---- shortcut: 1x1 conv (block-diagonal folded weight) + BN ----
    # (conv biases omitted everywhere: training-mode BN cancels them exactly)
    sc = jnp.dot(xc, ws_ref[...], preferred_element_type=jnp.float32)
    sc = _batchnorm_folded(sc, gbs_ref, s_ref, st_ref, inv_count)

    # ---- conv1 -> BN -> ReLU ----
    y1 = _conv3x3_folded(x32, xc, w1_ref, up_mask, down_mask)
    y1 = jnp.maximum(_batchnorm_folded(y1, gb1_ref, s_ref, st_ref, inv_count), 0.0)

    # ---- conv2 -> BN ----
    y2 = _conv3x3_folded(y1, y1.astype(w2_ref.dtype), w2_ref, up_mask, down_mask)
    y2 = _batchnorm_folded(y2, gb2_ref, s_ref, st_ref, inv_count)

    # ---- residual add + ReLU; lane-dense (last dim = W*Cout = 128) unmasked store ----
    out_ref[...] = jnp.maximum(y2 + sc, 0.0)


# ----------------------------------------------------------------------------------
# wrapper-side weight layout plumbing (tiny tensors, done once)
# ----------------------------------------------------------------------------------
def _toeplitz3x3(w_hwio, w_len):
    """(3,3,Ci,Co) HWIO conv weight -> (3, W*Ci, W*Co) block-Toeplitz matrices.

    The kw taps and the zero padding at the W edges are folded into the matrix,
    so each kh tap of the padding=1 conv becomes one lane-dense matmul.
    """
    kh_n, kw_n, ci, co = w_hwio.shape
    mats = []
    for kh in range(kh_n):
        m = jnp.zeros((w_len * ci, w_len * co), jnp.float32)
        for kw in range(kw_n):
            # output column w_o reads input column w_i = w_o + kw - 1
            band = jnp.eye(w_len, k=1 - kw, dtype=jnp.float32)            # [w_i, w_o]
            m = m + jnp.einsum("ab,ij->aibj", band,
                               w_hwio[kh, kw]).reshape(w_len * ci, w_len * co)
        mats.append(m)
    return jnp.stack(mats)


def _blockdiag1x1(ws, w_len):
    """(Ci, Co) 1x1-conv weight -> (W*Ci, W*Co) block-diagonal matrix."""
    ci, co = ws.shape
    return jnp.einsum("ab,ij->aibj", jnp.eye(w_len, dtype=jnp.float32),
                      ws).reshape(w_len * ci, w_len * co)


def residual_block(x_nchw, params, compute_dtype=jnp.bfloat16):
    """ResidualBlock forward (training-mode BatchNorm), NCHW in / NCHW out.

    compute_dtype controls only the MXU operand dtype (activation taps are cast at
    the point of use; rolls, BN statistics and the output stay fp32).  bfloat16 is
    the default: v5e's MXU is natively bf16 (fp32 matmul is multi-pass) and v6e/v7x
    get ~2x MXU rate.  Pass jnp.float32 to match PyTorch fp32 numerics tightly.
    """
    n, cin, h, w = x_nchw.shape
    cout = params["w1"].shape[-1]
    if cin == cout:
        # TODO(synk): identity-shortcut branch (in_channels == out_channels) not wired up.
        raise NotImplementedError("only the conv+BN shortcut branch (cin != cout) is implemented")
    if w * cin > 128 or w * cout > 128:
        # TODO(synk): gate — at real widths switch to NHWC per-tap matmuls + N/H grid.
        raise NotImplementedError("W-folded layout requires W*C <= 128")

    # NCHW -> W-folded (N*H, W*Cin): tiny channel axis packed with W onto the lanes.
    # TODO(synk): for real deployments keep activations W-folded/NHWC across blocks
    # instead of paying these HBM-bound transposes on both sides of the kernel.
    x_folded = jnp.transpose(x_nchw, (0, 2, 3, 1)).reshape(n * h, w * cin)
    x_folded = x_folded.astype(jnp.float32)

    w1_big = _toeplitz3x3(params["w1"], w).astype(compute_dtype)   # (3, W*Cin, W*Cout)
    w2_big = _toeplitz3x3(params["w2"], w).astype(compute_dtype)   # (3, W*Cout, W*Cout)
    ws_big = _blockdiag1x1(params["ws"], w).astype(compute_dtype)  # (W*Cin, W*Cout)
    # conv biases b1/b2/bs are NOT passed — training-mode BN cancels them exactly.

    stack_gb = lambda g, b: jnp.concatenate(
        [g.reshape(1, cout), b.reshape(1, cout)], axis=0).astype(jnp.float32)
    gb1 = stack_gb(params["g1"], params["beta1"])
    gb2 = stack_gb(params["g2"], params["beta2"])
    gbs = stack_gb(params["gs"], params["betas"])

    # lane<->channel fold / broadcast matrices for the BN statistics
    s_mat = jnp.tile(jnp.eye(cout, dtype=jnp.float32), (w, 1))     # (W*Cout, Cout)
    st_mat = jnp.tile(jnp.eye(cout, dtype=jnp.float32), (1, w))    # (Cout, W*Cout)

    args = (x_folded, w1_big, w2_big, ws_big, gb1, gb2, gbs, s_mat, st_mat)

    # scoped-VMEM budget from the actual footprint (+4x headroom for fp32
    # intermediates / relayouts / compiler scratch); v5e's default is only 16 MiB.
    arg_bytes = sum(int(np.prod(a.shape)) * a.dtype.itemsize for a in args)
    out_bytes = n * h * w * cout * 4
    vmem_limit = int(min(64 << 20, max(8 << 20, 4 * (arg_bytes + out_bytes))))

    vmem = lambda: pl.BlockSpec(memory_space=pltpu.MemorySpace.VMEM)
    out2d = pl.pallas_call(
        functools.partial(resblock_kernel, h_dim=h),
        out_shape=jax.ShapeDtypeStruct((n * h, w * cout), jnp.float32),
        in_specs=[vmem() for _ in args],
        out_specs=vmem(),
        compiler_params=pltpu.CompilerParams(vmem_limit_bytes=vmem_limit),
    )(*args)

    out = out2d.reshape(n, h, w, cout)
    return jnp.transpose(out, (0, 3, 1, 2))                        # back to NCHW


# ----------------------------------------------------------------------------------
# params + pure-JAX reference (mirrors the PyTorch module, incl. biases)
# ----------------------------------------------------------------------------------
def make_params(key, cin, cout):
    ks = jax.random.split(key, 6)

    def uinit(k, shape, fan_in):
        b = 1.0 / np.sqrt(fan_in)
        return jax.random.uniform(k, shape, jnp.float32, -b, b)

    return {
        "w1": uinit(ks[0], (3, 3, cin, cout), 9 * cin),    # HWIO
        "b1": uinit(ks[1], (1, cout), 9 * cin),
        "g1": jnp.ones((1, cout), jnp.float32),
        "beta1": jnp.zeros((1, cout), jnp.float32),
        "w2": uinit(ks[2], (3, 3, cout, cout), 9 * cout),
        "b2": uinit(ks[3], (1, cout), 9 * cout),
        "g2": jnp.ones((1, cout), jnp.float32),
        "beta2": jnp.zeros((1, cout), jnp.float32),
        "ws": uinit(ks[4], (cin, cout), cin),
        "bs": uinit(ks[5], (1, cout), cin),
        "gs": jnp.ones((1, cout), jnp.float32),
        "betas": jnp.zeros((1, cout), jnp.float32),
    }


def reference(x_nchw, p, cin, cout):
    """Pure-JAX reference matching the PyTorch forward (training-mode BN, with biases)."""
    x = jnp.transpose(x_nchw, (0, 2, 3, 1)).astype(jnp.float32)
    dn = ("NHWC", "HWIO", "NHWC")

    def conv(x, w, b, padding):
        y = lax.conv_general_dilated(x, w, (1, 1), padding, dimension_numbers=dn)
        return y + b.reshape(1, 1, 1, -1)

    def bn(y, g, b):
        m = jnp.mean(y, axis=(0, 1, 2), keepdims=True)
        v = jnp.mean((y - m) ** 2, axis=(0, 1, 2), keepdims=True)
        return (y - m) * lax.rsqrt(v + EPS) * g.reshape(1, 1, 1, -1) + b.reshape(1, 1, 1, -1)

    sc = bn(conv(x, p["ws"].reshape(1, 1, cin, cout), p["bs"], "VALID"), p["gs"], p["betas"])
    h = jax.nn.relu(bn(conv(x, p["w1"], p["b1"], "SAME"), p["g1"], p["beta1"]))
    h = bn(conv(h, p["w2"], p["b2"], "SAME"), p["g2"], p["beta2"])
    out = jax.nn.relu(h + sc)
    return jnp.transpose(out, (0, 3, 1, 2))


if __name__ == "__main__":
    N, CIN, COUT, H, W = 2, 4, 8, 16, 16

    key = jax.random.PRNGKey(0)
    kx, kp = jax.random.split(key)
    x = jax.random.normal(kx, (N, CIN, H, W), jnp.float32)
    params = make_params(kp, CIN, COUT)

    ref = jax.block_until_ready(reference(x, params, CIN, COUT))

    # fp32 MXU operands: tight elementwise check against the PyTorch-equivalent reference
    out_f32 = jax.block_until_ready(residual_block(x, params, compute_dtype=jnp.float32))
    assert out_f32.shape == (N, COUT, H, W), out_f32.shape
    np.testing.assert_allclose(np.asarray(out_f32), np.asarray(ref), rtol=3e-4, atol=3e-4)

    # default bf16 MXU operands (native on v5e, ~2x MXU on v6e/v7x): loose norm-relative check
    out_bf16 = jax.block_until_ready(residual_block(x, params))
    assert out_bf16.shape == (N, COUT, H, W), out_bf16.shape
    rel = np.linalg.norm(np.asarray(out_bf16) - np.asarray(ref)) / np.linalg.norm(np.asarray(ref))
    assert rel < 5e-2, f"bf16 path relative error too large: {rel}"

    print("KERNEL_OK")
</pallas_src>

<mosaic_0001>
module attributes {stable_mosaic.version = 11 : i64} {
  func.func @resblock_kernel(%arg0: memref<32x64xf32, #tpu.memory_space<vmem>>, %arg1: memref<3x64x128xf32, #tpu.memory_space<vmem>>, %arg2: memref<3x128x128xf32, #tpu.memory_space<vmem>>, %arg3: memref<64x128xf32, #tpu.memory_space<vmem>>, %arg4: memref<2x8xf32, #tpu.memory_space<vmem>>, %arg5: memref<2x8xf32, #tpu.memory_space<vmem>>, %arg6: memref<2x8xf32, #tpu.memory_space<vmem>>, %arg7: memref<128x8xf32, #tpu.memory_space<vmem>>, %arg8: memref<8x128xf32, #tpu.memory_space<vmem>>, %arg9: memref<32x128xf32, #tpu.memory_space<vmem>>) attributes {dimension_semantics = [], scalar_prefetch = 0 : i64, scratch_operands = 0 : i64, tpu.core_type = #tpu.core_type<tc>} {
    %0 = tpu.iota {dimensions = array<i32: 0>} : vector<32x1xi32>
    %c16_i32 = arith.constant 16 : i32
    %c0_i32 = arith.constant 0 : i32
    %1 = arith.cmpi eq, %c16_i32, %c0_i32 : i32
    %c1_i32 = arith.constant 1 : i32
    %2 = arith.select %1, %c1_i32, %c16_i32 : i32
    %3 = vector.broadcast %2 : i32 to vector<32x1xi32>
    %4 = arith.remsi %0, %3 : vector<32x1xi32>
    %c0_i32_0 = arith.constant 0 : i32
    %5 = vector.broadcast %c0_i32_0 : i32 to vector<32x1xi32>
    %6 = arith.cmpi ne, %4, %5 : vector<32x1xi32>
    %c0_i32_1 = arith.constant 0 : i32
    %7 = vector.broadcast %c0_i32_1 : i32 to vector<32x1xi32>
    %8 = arith.cmpi slt, %4, %7 : vector<32x1xi32>
    %c0_i32_2 = arith.constant 0 : i32
    %9 = arith.cmpi slt, %2, %c0_i32_2 : i32
    %10 = vector.broadcast %9 : i1 to vector<32x1xi1>
    %11 = vector.broadcast %10 : vector<32x1xi1> to vector<32x1xi1>
    %12 = arith.xori %8, %11 : vector<32x1xi1>
    %13 = arith.andi %12, %6 : vector<32x1xi1>
    %14 = vector.broadcast %2 : i32 to vector<32x1xi32>
    %15 = arith.addi %4, %14 : vector<32x1xi32>
    %16 = arith.select %13, %15, %4 : vector<32x1xi1>, vector<32x1xi32>
    %c0_i32_3 = arith.constant 0 : i32
    %17 = vector.broadcast %c0_i32_3 : i32 to vector<32x1xi32>
    %18 = arith.cmpi eq, %16, %17 : vector<32x1xi32>
    %c15_i32 = arith.constant 15 : i32
    %19 = vector.broadcast %c15_i32 : i32 to vector<32x1xi32>
    %20 = arith.cmpi eq, %16, %19 : vector<32x1xi32>
    %c0 = arith.constant 0 : index
    %c0_4 = arith.constant 0 : index
    %21 = vector.load %arg0[%c0, %c0_4] : memref<32x64xf32, #tpu.memory_space<vmem>>, vector<32x64xf32>
    %c0_5 = arith.constant 0 : index
    %c0_6 = arith.constant 0 : index
    %22 = vector.load %arg3[%c0_5, %c0_6] : memref<64x128xf32, #tpu.memory_space<vmem>>, vector<64x128xf32>
    %cst = arith.constant dense<0.000000e+00> : vector<32x128xf32>
    %23 = tpu.matmul %21, %22, %cst {dimension_numbers = #tpu.dot_dimension_numbers<[1], [0], [0], [1], [0, 0, 1, 1], [], []>} : vector<32x64xf32>, vector<64x128xf32>, vector<32x128xf32> -> vector<32x128xf32>
    %cst_7 = arith.constant dense<0.000000e+00> : vector<128xf32>
    %24 = vector.multi_reduction <add>, %23, %cst_7 [0] : vector<32x128xf32> to vector<128xf32>
    %25 = vector.shape_cast %24 : vector<128xf32> to vector<1x128xf32>
    %26 = arith.mulf %23, %23 : vector<32x128xf32>
    %cst_8 = arith.constant dense<0.000000e+00> : vector<128xf32>
    %27 = vector.multi_reduction <add>, %26, %cst_8 [0] : vector<32x128xf32> to vector<128xf32>
    %28 = vector.shape_cast %27 : vector<128xf32> to vector<1x128xf32>
    %29 = tpu.concatenate %25, %28 in 0 : vector<1x128xf32>, vector<1x128xf32> -> vector<2x128xf32>
    %c0_9 = arith.constant 0 : index
    %c0_10 = arith.constant 0 : index
    %30 = vector.load %arg7[%c0_9, %c0_10] : memref<128x8xf32, #tpu.memory_space<vmem>>, vector<128x8xf32>
    %cst_11 = arith.constant dense<0.000000e+00> : vector<2x8xf32>
    %31 = tpu.matmul %29, %30, %cst_11 {dimension_numbers = #tpu.dot_dimension_numbers<[1], [0], [0], [1], [0, 0, 1, 1], [], []>} : vector<2x128xf32>, vector<128x8xf32>, vector<2x8xf32> -> vector<2x8xf32>
    %cst_12 = arith.constant 0.001953125 : f32
    %32 = vector.broadcast %cst_12 : f32 to vector<2x8xf32>
    %33 = arith.mulf %31, %32 : vector<2x8xf32>
    %34 = vector.extract_strided_slice %33 {offsets = [0, 0], sizes = [1, 8], strides = [1, 1]} : vector<2x8xf32> to vector<1x8xf32>
    %35 = vector.extract_strided_slice %33 {offsets = [1, 0], sizes = [1, 8], strides = [1, 1]} : vector<2x8xf32> to vector<1x8xf32>
    %36 = arith.mulf %34, %34 : vector<1x8xf32>
    %37 = arith.subf %35, %36 : vector<1x8xf32>
    %cst_13 = arith.constant 0.000000e+00 : f32
    %38 = vector.broadcast %cst_13 : f32 to vector<1x8xf32>
    %39 = arith.maximumf %37, %38 : vector<1x8xf32>
    %cst_14 = arith.constant 9.99999974E-6 : f32
    %40 = vector.broadcast %cst_14 : f32 to vector<1x8xf32>
    %41 = arith.addf %39, %40 : vector<1x8xf32>
    %42 = math.rsqrt %41 : vector<1x8xf32>
    %c0_15 = arith.constant 0 : index
    %c0_16 = arith.constant 0 : index
    %43 = vector.load %arg6[%c0_15, %c0_16] : memref<2x8xf32, #tpu.memory_space<vmem>>, vector<1x8xf32>
    %44 = arith.mulf %42, %43 : vector<1x8xf32>
    %c1 = arith.constant 1 : index
    %c0_17 = arith.constant 0 : index
    %45 = vector.load %arg6[%c1, %c0_17] : memref<2x8xf32, #tpu.memory_space<vmem>>, vector<1x8xf32>
    %46 = arith.mulf %44, %34 : vector<1x8xf32>
    %47 = arith.subf %45, %46 : vector<1x8xf32>
    %48 = tpu.concatenate %44, %47 in 0 : vector<1x8xf32>, vector<1x8xf32> -> vector<2x8xf32>
    %c0_18 = arith.constant 0 : index
    %c0_19 = arith.constant 0 : index
    %49 = vector.load %arg8[%c0_18, %c0_19] : memref<8x128xf32, #tpu.memory_space<vmem>>, vector<8x128xf32>
    %cst_20 = arith.constant dense<0.000000e+00> : vector<2x128xf32>
    %50 = tpu.matmul %48, %49, %cst_20 {dimension_numbers = #tpu.dot_dimension_numbers<[1], [0], [0], [1], [0, 0, 1, 1], [], []>} : vector<2x8xf32>, vector<8x128xf32>, vector<2x128xf32> -> vector<2x128xf32>
    %51 = vector.extract_strided_slice %50 {offsets = [0, 0], sizes = [1, 128], strides = [1, 1]} : vector<2x128xf32> to vector<1x128xf32>
    %52 = vector.broadcast %51 : vector<1x128xf32> to vector<32x128xf32>
    %53 = arith.mulf %23, %52 : vector<32x128xf32>
    %54 = vector.extract_strided_slice %50 {offsets = [1, 0], sizes = [1, 128], strides = [1, 1]} : vector<2x128xf32> to vector<1x128xf32>
    %55 = vector.broadcast %54 : vector<1x128xf32> to vector<32x128xf32>
    %56 = arith.addf %53, %55 : vector<32x128xf32>
    %c1_i32_21 = arith.constant 1 : i32
    %57 = tpu.dynamic_rotate %21 by %c1_i32_21 dim 0 : vector<32x64xf32>, i32 -> vector<32x64xf32>
    %cst_22 = arith.constant 0.000000e+00 : f32
    %58 = vector.shape_cast %18 : vector<32x1xi1> to vector<32x1xi1>
    %59 = vector.broadcast %58 : vector<32x1xi1> to vector<32x64xi1>
    %60 = vector.broadcast %cst_22 : f32 to vector<32x64xf32>
    %61 = arith.select %59, %60, %57 : vector<32x64xi1>, vector<32x64xf32>
    %c31_i32 = arith.constant 31 : i32
    %62 = tpu.dynamic_rotate %21 by %c31_i32 dim 0 : vector<32x64xf32>, i32 -> vector<32x64xf32>
    %cst_23 = arith.constant 0.000000e+00 : f32
    %63 = vector.shape_cast %20 : vector<32x1xi1> to vector<32x1xi1>
    %64 = vector.broadcast %63 : vector<32x1xi1> to vector<32x64xi1>
    %65 = vector.broadcast %cst_23 : f32 to vector<32x64xf32>
    %66 = arith.select %64, %65, %62 : vector<32x64xi1>, vector<32x64xf32>
    %c0_24 = arith.constant 0 : index
    %c0_25 = arith.constant 0 : index
    %c0_26 = arith.constant 0 : index
    %67 = vector.load %arg1[%c0_24, %c0_25, %c0_26] : memref<3x64x128xf32, #tpu.memory_space<vmem>>, vector<1x64x128xf32>
    %68 = vector.shape_cast %67 : vector<1x64x128xf32> to vector<64x128xf32>
    %cst_27 = arith.constant dense<0.000000e+00> : vector<32x128xf32>
    %69 = tpu.matmul %61, %68, %cst_27 {dimension_numbers = #tpu.dot_dimension_numbers<[1], [0], [0], [1], [0, 0, 1, 1], [], []>} : vector<32x64xf32>, vector<64x128xf32>, vector<32x128xf32> -> vector<32x128xf32>
    %c1_28 = arith.constant 1 : index
    %c0_29 = arith.constant 0 : index
    %c0_30 = arith.constant 0 : index
    %70 = vector.load %arg1[%c1_28, %c0_29, %c0_30] : memref<3x64x128xf32, #tpu.memory_space<vmem>>, vector<1x64x128xf32>
    %71 = vector.shape_cast %70 : vector<1x64x128xf32> to vector<64x128xf32>
    %cst_31 = arith.constant dense<0.000000e+00> : vector<32x128xf32>
    %72 = tpu.matmul %21, %71, %cst_31 {dimension_numbers = #tpu.dot_dimension_numbers<[1], [0], [0], [1], [0, 0, 1, 1], [], []>} : vector<32x64xf32>, vector<64x128xf32>, vector<32x128xf32> -> vector<32x128xf32>
    %73 = arith.addf %69, %72 : vector<32x128xf32>
    %c2 = arith.constant 2 : index
    %c0_32 = arith.constant 0 : index
    %c0_33 = arith.constant 0 : index
    %74 = vector.load %arg1[%c2, %c0_32, %c0_33] : memref<3x64x128xf32, #tpu.memory_space<vmem>>, vector<1x64x128xf32>
    %75 = vector.shape_cast %74 : vector<1x64x128xf32> to vector<64x128xf32>
    %cst_34 = arith.constant dense<0.000000e+00> : vector<32x128xf32>
    %76 = tpu.matmul %66, %75, %cst_34 {dimension_numbers = #tpu.dot_dimension_numbers<[1], [0], [0], [1], [0, 0, 1, 1], [], []>} : vector<32x64xf32>, vector<64x128xf32>, vector<32x128xf32> -> vector<32x128xf32>
    %77 = arith.addf %73, %76 : vector<32x128xf32>
    %cst_35 = arith.constant dense<0.000000e+00> : vector<128xf32>
    %78 = vector.multi_reduction <add>, %77, %cst_35 [0] : vector<32x128xf32> to vector<128xf32>
    %79 = vector.shape_cast %78 : vector<128xf32> to vector<1x128xf32>
    %80 = arith.mulf %77, %77 : vector<32x128xf32>
    %cst_36 = arith.constant dense<0.000000e+00> : vector<128xf32>
    %81 = vector.multi_reduction <add>, %80, %cst_36 [0] : vector<32x128xf32> to vector<128xf32>
    %82 = vector.shape_cast %81 : vector<128xf32> to vector<1x128xf32>
    %83 = tpu.concatenate %79, %82 in 0 : vector<1x128xf32>, vector<1x128xf32> -> vector<2x128xf32>
    %c0_37 = arith.constant 0 : index
    %c0_38 = arith.constant 0 : index
    %84 = vector.load %arg7[%c0_37, %c0_38] : memref<128x8xf32, #tpu.memory_space<vmem>>, vector<128x8xf32>
    %cst_39 = arith.constant dense<0.000000e+00> : vector<2x8xf32>
    %85 = tpu.matmul %83, %84, %cst_39 {dimension_numbers = #tpu.dot_dimension_numbers<[1], [0], [0], [1], [0, 0, 1, 1], [], []>} : vector<2x128xf32>, vector<128x8xf32>, vector<2x8xf32> -> vector<2x8xf32>
    %cst_40 = arith.constant 0.001953125 : f32
    %86 = vector.broadcast %cst_40 : f32 to vector<2x8xf32>
    %87 = arith.mulf %85, %86 : vector<2x8xf32>
    %88 = vector.extract_strided_slice %87 {offsets = [0, 0], sizes = [1, 8], strides = [1, 1]} : vector<2x8xf32> to vector<1x8xf32>
    %89 = vector.extract_strided_slice %87 {offsets = [1, 0], sizes = [1, 8], strides = [1, 1]} : vector<2x8xf32> to vector<1x8xf32>
    %90 = arith.mulf %88, %88 : vector<1x8xf32>
    %91 = arith.subf %89, %90 : vector<1x8xf32>
    %cst_41 = arith.constant 0.000000e+00 : f32
    %92 = vector.broadcast %cst_41 : f32 to vector<1x8xf32>
    %93 = arith.maximumf %91, %92 : vector<1x8xf32>
    %cst_42 = arith.constant 9.99999974E-6 : f32
    %94 = vector.broadcast %cst_42 : f32 to vector<1x8xf32>
    %95 = arith.addf %93, %94 : vector<1x8xf32>
    %96 = math.rsqrt %95 : vector<1x8xf32>
    %c0_43 = arith.constant 0 : index
    %c0_44 = arith.constant 0 : index
    %97 = vector.load %arg4[%c0_43, %c0_44] : memref<2x8xf32, #tpu.memory_space<vmem>>, vector<1x8xf32>
    %98 = arith.mulf %96, %97 : vector<1x8xf32>
    %c1_45 = arith.constant 1 : index
    %c0_46 = arith.constant 0 : index
    %99 = vector.load %arg4[%c1_45, %c0_46] : memref<2x8xf32, #tpu.memory_space<vmem>>, vector<1x8xf32>
    %100 = arith.mulf %98, %88 : vector<1x8xf32>
    %101 = arith.subf %99, %100 : vector<1x8xf32>
    %102 = tpu.concatenate %98, %101 in 0 : vector<1x8xf32>, vector<1x8xf32> -> vector<2x8xf32>
    %c0_47 = arith.constant 0 : index
    %c0_48 = arith.constant 0 : index
    %103 = vector.load %arg8[%c0_47, %c0_48] : memref<8x128xf32, #tpu.memory_space<vmem>>, vector<8x128xf32>
    %cst_49 = arith.constant dense<0.000000e+00> : vector<2x128xf32>
    %104 = tpu.matmul %102, %103, %cst_49 {dimension_numbers = #tpu.dot_dimension_numbers<[1], [0], [0], [1], [0, 0, 1, 1], [], []>} : vector<2x8xf32>, vector<8x128xf32>, vector<2x128xf32> -> vector<2x128xf32>
    %105 = vector.extract_strided_slice %104 {offsets = [0, 0], sizes = [1, 128], strides = [1, 1]} : vector<2x128xf32> to vector<1x128xf32>
    %106 = vector.broadcast %105 : vector<1x128xf32> to vector<32x128xf32>
    %107 = arith.mulf %77, %106 : vector<32x128xf32>
    %108 = vector.extract_strided_slice %104 {offsets = [1, 0], sizes = [1, 128], strides = [1, 1]} : vector<2x128xf32> to vector<1x128xf32>
    %109 = vector.broadcast %108 : vector<1x128xf32> to vector<32x128xf32>
    %110 = arith.addf %107, %109 : vector<32x128xf32>
    %cst_50 = arith.constant 0.000000e+00 : f32
    %111 = vector.broadcast %cst_50 : f32 to vector<32x128xf32>
    %112 = arith.maximumf %110, %111 : vector<32x128xf32>
    %c1_i32_51 = arith.constant 1 : i32
    %113 = tpu.dynamic_rotate %112 by %c1_i32_51 dim 0 : vector<32x128xf32>, i32 -> vector<32x128xf32>
    %cst_52 = arith.constant 0.000000e+00 : f32
    %114 = vector.shape_cast %18 : vector<32x1xi1> to vector<32x1xi1>
    %115 = vector.broadcast %114 : vector<32x1xi1> to vector<32x128xi1>
    %116 = vector.broadcast %cst_52 : f32 to vector<32x128xf32>
    %117 = arith.select %115, %116, %113 : vector<32x128xi1>, vector<32x128xf32>
    %c31_i32_53 = arith.constant 31 : i32
    %118 = tpu.dynamic_rotate %112 by %c31_i32_53 dim 0 : vector<32x128xf32>, i32 -> vector<32x128xf32>
    %cst_54 = arith.constant 0.000000e+00 : f32
    %119 = vector.shape_cast %20 : vector<32x1xi1> to vector<32x1xi1>
    %120 = vector.broadcast %119 : vector<32x1xi1> to vector<32x128xi1>
    %121 = vector.broadcast %cst_54 : f32 to vector<32x128xf32>
    %122 = arith.select %120, %121, %118 : vector<32x128xi1>, vector<32x128xf32>
    %c0_55 = arith.constant 0 : index
    %c0_56 = arith.constant 0 : index
    %c0_57 = arith.constant 0 : index
    %123 = vector.load %arg2[%c0_55, %c0_56, %c0_57] : memref<3x128x128xf32, #tpu.memory_space<vmem>>, vector<1x128x128xf32>
    %124 = vector.shape_cast %123 : vector<1x128x128xf32> to vector<128x128xf32>
    %cst_58 = arith.constant dense<0.000000e+00> : vector<32x128xf32>
    %125 = tpu.matmul %117, %124, %cst_58 {dimension_numbers = #tpu.dot_dimension_numbers<[1], [0], [0], [1], [0, 0, 1, 1], [], []>} : vector<32x128xf32>, vector<128x128xf32>, vector<32x128xf32> -> vector<32x128xf32>
    %c1_59 = arith.constant 1 : index
    %c0_60 = arith.constant 0 : index
    %c0_61 = arith.constant 0 : index
    %126 = vector.load %arg2[%c1_59, %c0_60, %c0_61] : memref<3x128x128xf32, #tpu.memory_space<vmem>>, vector<1x128x128xf32>
    %127 = vector.shape_cast %126 : vector<1x128x128xf32> to vector<128x128xf32>
    %cst_62 = arith.constant dense<0.000000e+00> : vector<32x128xf32>
    %128 = tpu.matmul %112, %127, %cst_62 {dimension_numbers = #tpu.dot_dimension_numbers<[1], [0], [0], [1], [0, 0, 1, 1], [], []>} : vector<32x128xf32>, vector<128x128xf32>, vector<32x128xf32> -> vector<32x128xf32>
    %129 = arith.addf %125, %128 : vector<32x128xf32>
    %c2_63 = arith.constant 2 : index
    %c0_64 = arith.constant 0 : index
    %c0_65 = arith.constant 0 : index
    %130 = vector.load %arg2[%c2_63, %c0_64, %c0_65] : memref<3x128x128xf32, #tpu.memory_space<vmem>>, vector<1x128x128xf32>
    %131 = vector.shape_cast %130 : vector<1x128x128xf32> to vector<128x128xf32>
    %cst_66 = arith.constant dense<0.000000e+00> : vector<32x128xf32>
    %132 = tpu.matmul %122, %131, %cst_66 {dimension_numbers = #tpu.dot_dimension_numbers<[1], [0], [0], [1], [0, 0, 1, 1], [], []>} : vector<32x128xf32>, vector<128x128xf32>, vector<32x128xf32> -> vector<32x128xf32>
    %133 = arith.addf %129, %132 : vector<32x128xf32>
    %cst_67 = arith.constant dense<0.000000e+00> : vector<128xf32>
    %134 = vector.multi_reduction <add>, %133, %cst_67 [0] : vector<32x128xf32> to vector<128xf32>
    %135 = vector.shape_cast %134 : vector<128xf32> to vector<1x128xf32>
    %136 = arith.mulf %133, %133 : vector<32x128xf32>
    %cst_68 = arith.constant dense<0.000000e+00> : vector<128xf32>
    %137 = vector.multi_reduction <add>, %136, %cst_68 [0] : vector<32x128xf32> to vector<128xf32>
    %138 = vector.shape_cast %137 : vector<128xf32> to vector<1x128xf32>
    %139 = tpu.concatenate %135, %138 in 0 : vector<1x128xf32>, vector<1x128xf32> -> vector<2x128xf32>
    %c0_69 = arith.constant 0 : index
    %c0_70 = arith.constant 0 : index
    %140 = vector.load %arg7[%c0_69, %c0_70] : memref<128x8xf32, #tpu.memory_space<vmem>>, vector<128x8xf32>
    %cst_71 = arith.constant dense<0.000000e+00> : vector<2x8xf32>
    %141 = tpu.matmul %139, %140, %cst_71 {dimension_numbers = #tpu.dot_dimension_numbers<[1], [0], [0], [1], [0, 0, 1, 1], [], []>} : vector<2x128xf32>, vector<128x8xf32>, vector<2x8xf32> -> vector<2x8xf32>
    %cst_72 = arith.constant 0.001953125 : f32
    %142 = vector.broadcast %cst_72 : f32 to vector<2x8xf32>
    %143 = arith.mulf %141, %142 : vector<2x8xf32>
    %144 = vector.extract_strided_slice %143 {offsets = [0, 0], sizes = [1, 8], strides = [1, 1]} : vector<2x8xf32> to vector<1x8xf32>
    %145 = vector.extract_strided_slice %143 {offsets = [1, 0], sizes = [1, 8], strides = [1, 1]} : vector<2x8xf32> to vector<1x8xf32>
    %146 = arith.mulf %144, %144 : vector<1x8xf32>
    %147 = arith.subf %145, %146 : vector<1x8xf32>
    %cst_73 = arith.constant 0.000000e+00 : f32
    %148 = vector.broadcast %cst_73 : f32 to vector<1x8xf32>
    %149 = arith.maximumf %147, %148 : vector<1x8xf32>
    %cst_74 = arith.constant 9.99999974E-6 : f32
    %150 = vector.broadcast %cst_74 : f32 to vector<1x8xf32>
    %151 = arith.addf %149, %150 : vector<1x8xf32>
    %152 = math.rsqrt %151 : vector<1x8xf32>
    %c0_75 = arith.constant 0 : index
    %c0_76 = arith.constant 0 : index
    %153 = vector.load %arg5[%c0_75, %c0_76] : memref<2x8xf32, #tpu.memory_space<vmem>>, vector<1x8xf32>
    %154 = arith.mulf %152, %153 : vector<1x8xf32>
    %c1_77 = arith.constant 1 : index
    %c0_78 = arith.constant 0 : index
    %155 = vector.load %arg5[%c1_77, %c0_78] : memref<2x8xf32, #tpu.memory_space<vmem>>, vector<1x8xf32>
    %156 = arith.mulf %154, %144 : vector<1x8xf32>
    %157 = arith.subf %155, %156 : vector<1x8xf32>
    %158 = tpu.concatenate %154, %157 in 0 : vector<1x8xf32>, vector<1x8xf32> -> vector<2x8xf32>
    %c0_79 = arith.constant 0 : index
    %c0_80 = arith.constant 0 : index
    %159 = vector.load %arg8[%c0_79, %c0_80] : memref<8x128xf32, #tpu.memory_space<vmem>>, vector<8x128xf32>
    %cst_81 = arith.constant dense<0.000000e+00> : vector<2x128xf32>
    %160 = tpu.matmul %158, %159, %cst_81 {dimension_numbers = #tpu.dot_dimension_numbers<[1], [0], [0], [1], [0, 0, 1, 1], [], []>} : vector<2x8xf32>, vector<8x128xf32>, vector<2x128xf32> -> vector<2x128xf32>
    %161 = vector.extract_strided_slice %160 {offsets = [0, 0], sizes = [1, 128], strides = [1, 1]} : vector<2x128xf32> to vector<1x128xf32>
    %162 = vector.broadcast %161 : vector<1x128xf32> to vector<32x128xf32>
    %163 = arith.mulf %133, %162 : vector<32x128xf32>
    %164 = vector.extract_strided_slice %160 {offsets = [1, 0], sizes = [1, 128], strides = [1, 1]} : vector<2x128xf32> to vector<1x128xf32>
    %165 = vector.broadcast %164 : vector<1x128xf32> to vector<32x128xf32>
    %166 = arith.addf %163, %165 : vector<32x128xf32>
    %167 = arith.addf %166, %56 : vector<32x128xf32>
    %cst_82 = arith.constant 0.000000e+00 : f32
    %168 = vector.broadcast %cst_82 : f32 to vector<32x128xf32>
    %169 = arith.maximumf %167, %168 : vector<32x128xf32>
    %c0_83 = arith.constant 0 : index
    %c0_84 = arith.constant 0 : index
    %170 = vector.load %arg9[%c0_83, %c0_84] : memref<32x128xf32, #tpu.memory_space<vmem>>, vector<32x128xf32>
    tpu.vector_store %arg9[%c0_83, %c0_84], %169 {strides = array<i32>} : memref<32x128xf32, #tpu.memory_space<vmem>>, vector<32x128xf32>,
    return
  }
}

</mosaic_0001>

<llo_original>
// kernel: tpu_custom_call.1
$region0: #{tpu_custom_call.1}
  #allocation0 [shape = 'u32[]', space=smem, size = 0x4, offset = 0x4, fixed_abs, tag = 'smem constant byte address 0x4 - core index']
  #allocation1 [shape = 'u32[144,128]{1,0:T(1,128)}', space=vmem, size = 0x12000, scoped, tag = 'internal scratch']
  %s0 = inlined_call_operand.vmem [shape: f32[32,64], index: 0, kind: input, shape index: {}]
  %s1 = inlined_call_operand.hbm [shape: f32[3,64,128], index: 1, kind: input, shape index: {}]
  %s2 = inlined_call_operand.hbm [shape: f32[3,128,128], index: 2, kind: input, shape index: {}]
  %s3 = inlined_call_operand.vmem [shape: f32[64,128], index: 3, kind: input, shape index: {}]
  %s4 = inlined_call_operand.vmem [shape: f32[2,8], index: 4, kind: input, shape index: {}]
  %s5 = inlined_call_operand.vmem [shape: f32[2,8], index: 5, kind: input, shape index: {}]
  %s6 = inlined_call_operand.vmem [shape: f32[2,8], index: 6, kind: input, shape index: {}]
  %s7 = inlined_call_operand.vmem [shape: f32[128,8], index: 7, kind: input, shape index: {}]
  %s8 = inlined_call_operand.vmem [shape: f32[8,128], index: 8, kind: input, shape index: {}]
  %s9 = inlined_call_operand.hbm [shape: f32[32,128], index: 9, kind: output, shape index: {}]
  %s10 = sld [smem:[#allocation0]]
  $region54: #{tpu_custom_call.1} parent=0
    _
  %s12 = ssub.s32 1, %s10
  %s13 = scalar_select 0, %s12, %s10
  $region1: #{tpu_custom_call.1} parent=0
    #allocation2 [shape = 'u8[98304]{0}', space=vmem, size = 0x18000, scoped, tag = 'input window, operand 1, single buffered']
    #allocation3 [shape = 's32[1]{0}', space=sflag, size = 0x4, scoped, tag = 'scoped memory for tpu_custom_call.1']
    #allocation4 [shape = 's32[1]{0}', space=sflag, size = 0x4, scoped, tag = 'scoped memory for tpu_custom_call.1']
    #allocation5 [shape = 'u8[196608]{0}', space=vmem, size = 0x30000, scoped, tag = 'input window, operand 2, single buffered']
    #allocation6 [shape = 's32[1]{0}', space=sflag, size = 0x4, scoped, tag = 'scoped memory for tpu_custom_call.1']
    #allocation7 [shape = 'u8[16384]{0}', space=vmem, size = 0x4000, scoped, tag = 'output window, operand 0, single buffered']
    %14 = vsyncpa [#allocation3], 0
    %15 = vsyncpa [#allocation6], 0
    %16 = vsyncpa [#allocation4], 0
    // Predicated region
    $region2: #{tpu_custom_call.1} parent=1 // pred_check
      _
    $region3: #{tpu_custom_call.1} parent=1 // pred_check_branch
      %18 = sbr.rel (0) target = $region5
    $region4: #{tpu_custom_call.1} parent=1 // pred_region
      _
    $region5: #{tpu_custom_call.1} parent=1 // pred_fallthru
      _
    // Predicated region
    $region6: #{tpu_custom_call.1} parent=1 // pred_check
      _
    $region7: #{tpu_custom_call.1} parent=1 // pred_check_branch
      %20 = sbr.rel (0) target = $region9
    $region8: #{tpu_custom_call.1} parent=1 // pred_region
      %s22 = ssub.s32 3072, 3072
      %23 = vsyncadd [#allocation3], %s22
      %s24 = sshll.u32 [#allocation2], 4
      %s25 = int_to_ptr.vmem [resolvable:$true] %s24
      %30 = dma.hbm_to_vmem [thread:$0]  %s1, 3072, %s25, [#allocation3], 128, 128, 8
    $region9: #{tpu_custom_call.1} parent=1 // pred_fallthru
      _
    // Predicated region
    $region10: #{tpu_custom_call.1} parent=1 // pred_check
      _
    $region11: #{tpu_custom_call.1} parent=1 // pred_check_branch
      %32 = sbr.rel (0) target = $region13
    $region12: #{tpu_custom_call.1} parent=1 // pred_region
      %s34 = ssub.s32 6144, 6144
      %35 = vsyncadd [#allocation6], %s34
      %s36 = sshll.u32 [#allocation5], 4
      %s37 = int_to_ptr.vmem [resolvable:$true] %s36
      %42 = dma.hbm_to_vmem [thread:$0]  %s2, 6144, %s37, [#allocation6], 128, 128, 8
    $region13: #{tpu_custom_call.1} parent=1 // pred_fallthru
      _
    // Predicated region
    $region14: #{tpu_custom_call.1} parent=1 // pred_check
      _
    $region15: #{tpu_custom_call.1} parent=1 // pred_check_branch
      %44 = sbr.rel (0) target = $region17
    $region16: #{tpu_custom_call.1} parent=1 // pred_region
      _
    $region17: #{tpu_custom_call.1} parent=1 // pred_fallthru
      _
    // Predicated region
    $region18: #{tpu_custom_call.1} parent=1 // pred_check
      _
    $region19: #{tpu_custom_call.1} parent=1 // pred_check_branch
      %46 = sbr.rel (0) target = $region21
    $region20: #{tpu_custom_call.1} parent=1 // pred_region
      _
    $region21: #{tpu_custom_call.1} parent=1 // pred_fallthru
      _
    // Predicated region
    $region22: #{tpu_custom_call.1} parent=1 // pred_check
      _
    $region23: #{tpu_custom_call.1} parent=1 // pred_check_branch
      %48 = sbr.rel (0) target = $region25
    $region24: #{tpu_custom_call.1} parent=1 // pred_region
      _
    $region25: #{tpu_custom_call.1} parent=1 // pred_fallthru
      _
    // Predicated region
    $region26: #{tpu_custom_call.1} parent=1 // pred_check
      _
    $region27: #{tpu_custom_call.1} parent=1 // pred_check_branch
      %50 = sbr.rel (0) target = $region29
    $region28: #{tpu_custom_call.1} parent=1 // pred_region
      _
    $region29: #{tpu_custom_call.1} parent=1 // pred_fallthru
      _
    // Predicated region
    $region30: #{tpu_custom_call.1} parent=1 // pred_check
      _
    $region31: #{tpu_custom_call.1} parent=1 // pred_check_branch
      %52 = sbr.rel (0) target = $region33
    $region32: #{tpu_custom_call.1} parent=1 // pred_region
      _
    $region33: #{tpu_custom_call.1} parent=1 // pred_fallthru
      _
    // Predicated region
    $region34: #{tpu_custom_call.1} parent=1 // pred_check
      _
    $region35: #{tpu_custom_call.1} parent=1 // pred_check_branch
      %54 = sbr.rel (0) target = $region37
    $region36: #{tpu_custom_call.1} parent=1 // pred_region
      _
    $region37: #{tpu_custom_call.1} parent=1 // pred_fallthru
      _
    // Predicated region
    $region38: #{tpu_custom_call.1} parent=1 // pred_check
      _
    $region39: #{tpu_custom_call.1} parent=1 // pred_check_branch
      %56 = sbr.rel (0) target = $region41
    $region40: #{tpu_custom_call.1} parent=1 // pred_region
      %57 = dma.done [#allocation3], 3072
    $region41: #{tpu_custom_call.1} parent=1 // pred_fallthru
      _
    // Predicated region
    $region42: #{tpu_custom_call.1} parent=1 // pred_check
      _
    $region43: #{tpu_custom_call.1} parent=1 // pred_check_branch
      %59 = sbr.rel (0) target = $region45
    $region44: #{tpu_custom_call.1} parent=1 // pred_region
      %60 = dma.done [#allocation6], 6144
    $region45: #{tpu_custom_call.1} parent=1 // pred_fallthru
      _
    %v61 = vlaneseq
    %v62 = vshrl.u32 %v61, 7
    %v63 = vadd.s32 %v62, 8
    %v64 = vadd.s32 %v62, 16
    %v65 = vadd.s32 %v62, 24
    %vm66 = vcmp.lt.s32.totalorder %v62, 0
    %v67 = vsub.s32 0, %v62
    %v68 = vsel %vm66, %v67, %v62
    %v69 = vshrl.u32 %v68, 4
    %v70 = vand.u32 %v68, 15
    %v71 = vsub.s32 0, %v70
    %v72 = vsel %vm66, %v71, %v70
    %vm73 = vcmp.lt.s32.totalorder %v63, 0
    %v74 = vsub.s32 0, %v63
    %v75 = vsel %vm73, %v74, %v63
    %v76 = vshrl.u32 %v75, 4
    %v77 = vand.u32 %v75, 15
    %v78 = vsub.s32 0, %v77
    %v79 = vsel %vm73, %v78, %v77
    %vm80 = vcmp.lt.s32.totalorder %v64, 0
    %v81 = vsub.s32 0, %v64
    %v82 = vsel %vm80, %v81, %v64
    %v83 = vshrl.u32 %v82, 4
    %v84 = vand.u32 %v82, 15
    %v85 = vsub.s32 0, %v84
    %v86 = vsel %vm80, %v85, %v84
    %vm87 = vcmp.lt.s32.totalorder %v65, 0
    %v88 = vsub.s32 0, %v65
    %v89 = vsel %vm87, %v88, %v65
    %v90 = vshrl.u32 %v89, 4
    %v91 = vand.u32 %v89, 15
    %v92 = vsub.s32 0, %v91
    %v93 = vsel %vm87, %v92, %v91
    %vm94 = vcmp.ne.s32.totalorder %v72, 0
    %vm95 = vcmp.ne.s32.totalorder %v79, 0
    %vm96 = vcmp.ne.s32.totalorder %v86, 0
    %vm97 = vcmp.ne.s32.totalorder %v93, 0
    %vm98 = vcmp.lt.s32.totalorder %v72, 0
    %vm99 = vcmp.lt.s32.totalorder %v79, 0
    %vm100 = vcmp.lt.s32.totalorder %v86, 0
    %vm101 = vcmp.lt.s32.totalorder %v93, 0
    %vm102 = vmand %vm98, %vm94
    %vm103 = vmand %vm99, %vm95
    %vm104 = vmand %vm100, %vm96
    %vm105 = vmand %vm101, %vm97
    %v106 = vadd.s32 %v72, 16
    %v107 = vadd.s32 %v79, 16
    %v108 = vadd.s32 %v86, 16
    %v109 = vadd.s32 %v93, 16
    %v110 = vsel %vm102, %v106, %v72
    %v111 = vsel %vm103, %v107, %v79
    %v112 = vsel %vm104, %v108, %v86
    %v113 = vsel %vm105, %v109, %v93
    %vm114 = vcmp.eq.s32.totalorder %v110, 0
    %vm115 = vcmp.eq.s32.totalorder %v111, 0
    %vm116 = vcmp.eq.s32.totalorder %v112, 0
    %vm117 = vcmp.eq.s32.totalorder %v113, 0
    %vm118 = vcmp.eq.s32.totalorder %v110, 15
    %vm119 = vcmp.eq.s32.totalorder %v111, 15
    %vm120 = vcmp.eq.s32.totalorder %v112, 15
    %vm121 = vcmp.eq.s32.totalorder %v113, 15
    %v122 = vld [vmem:[%s0] sm:$0xff]
    %v123 = vld [vmem:[%s0 + $0x8] sm:$0xff]
    %v124 = vld [vmem:[%s0 + $0x10] sm:$0xff]
    %v125 = vld [vmem:[%s0 + $0x18] sm:$0xff]
    %v126 = vld [vmem:[%s3] sm:$0xff]
    %v127 = vld [vmem:[%s3 + $0x8] sm:$0xff]
    %v128 = vld [vmem:[%s3 + $0x10] sm:$0xff]
    %v129 = vld [vmem:[%s3 + $0x18] sm:$0xff]
    %v130 = vld [vmem:[%s3 + $0x20] sm:$0xff]
    %v131 = vld [vmem:[%s3 + $0x28] sm:$0xff]
    %v132 = vld [vmem:[%s3 + $0x30] sm:$0xff]
    %v133 = vld [vmem:[%s3 + $0x38] sm:$0xff]
    %vm134 = vcmask 523264
    %v136 = vsel %vm134, %v122, 0
    %v139 = vsel %vm134, %v123, 0
    %v142 = vsel %vm134, %v124, 0
    %v145 = vsel %vm134, %v125, 0
    %147 = vmatprep.subr.mxu0 0.0
    %148 = vmatpush1.msra.mxu0 %v126
    %149 = vmatprep.subr.mxu0 0.0
    %150 = vmatpush1.msra.mxu0 %v127
    %151 = vmatprep.subr.mxu0 0.0
    %152 = vmatpush1.msra.mxu0 %v128
    %153 = vmatprep.subr.mxu0 0.0
    %154 = vmatpush1.msra.mxu0 %v129
    %155 = vmatprep.subr.mxu0 0.0
    %156 = vmatpush1.msra.mxu0 %v130
    %157 = vmatprep.subr.mxu0 0.0
    %158 = vmatpush1.msra.mxu0 %v131
    %159 = vmatprep.subr.mxu0 0.0
    %160 = vmatpush1.msra.mxu0 %v132
    %161 = vmatprep.subr.mxu0 0.0
    %162 = vmatpush1.msra.mxu0 %v133
    %163 = vmatprep.subr.mxu0 0.0
    %164 = vmatpush1.msra.mxu0 0.0
    %165 = vmatprep.subr.mxu0 0.0
    %166 = vmatpush1.msra.mxu0 0.0
    %167 = vmatprep.subr.mxu0 0.0
    %168 = vmatpush1.msra.mxu0 0.0
    %169 = vmatprep.subr.mxu0 0.0
    %170 = vmatpush1.msra.mxu0 0.0
    %171 = vmatprep.subr.mxu0 0.0
    %172 = vmatpush1.msra.mxu0 0.0
    %173 = vmatprep.subr.mxu0 0.0
    %174 = vmatpush1.msra.mxu0 0.0
    %175 = vmatprep.subr.mxu0 0.0
    %176 = vmatpush1.msra.mxu0 0.0
    %177 = vmatprep.subr.mxu0 0.0
    %178 = vmatpush1.msra.mxu0 0.0
    %179 = vmatprep.subr.mxu0 0.0
    %180 = vmatpush1.msra.mxu0 0.0
    %181 = vmatprep.subr.mxu0 0.0
    %182 = vmatpush1.msra.mxu0 0.0
    %183 = vmatprep.subr.mxu0 0.0
    %184 = vmatpush1.msra.mxu0 0.0
    %185 = vmatprep.subr.mxu0 0.0
    %186 = vmatpush1.msra.mxu0 0.0
    %187 = vmatprep.subr.mxu0 0.0
    %188 = vmatpush1.msra.mxu0 0.0
    %189 = vmatprep.subr.mxu0 0.0
    %190 = vmatpush1.msra.mxu0 0.0
    %191 = vmatprep.subr.mxu0 0.0
    %192 = vmatpush1.msra.mxu0 0.0
    %193 = vmatprep.subr.mxu0 0.0
    %194 = vmatpush1.msra.mxu0 0.0
    %195 = vmatprep.subr.mxu0 0.0
    %196 = vmatpush1.msra.mxu0 0.0
    %197 = vmatprep.subr.mxu0 0.0
    %198 = vmatpush1.msra.mxu0 0.0
    %199 = vmatprep.subr.mxu0 0.0
    %200 = vmatpush1.msra.mxu0 0.0
    %201 = vmatprep.subr.mxu0 0.0
    %202 = vmatpush1.msra.mxu0 0.0
    %203 = vmatprep.subr.mxu0 0.0
    %204 = vmatpush1.msra.mxu0 0.0
    %205 = vmatprep.subr.mxu0 0.0
    %206 = vmatpush1.msra.mxu0 0.0
    %207 = vmatprep.subr.mxu0 0.0
    %208 = vmatpush1.msra.mxu0 0.0
    %209 = vmatprep.subr.mxu0 0.0
    %210 = vmatpush1.msra.mxu0 0.0
    %211 = vmatprep.mubr.f32.mxu0 0.0
    %212 = vmatmul.mubr.f32.gmra.mrb[0].mxu0 %v136
    %v213 = vpop.f32.mrb[0].mxu0
    %v214 = vadd.f32 0.0, %v213
    %v215 = vpop.f32.mrb[0].mxu0
    %216 = vmatprep.mubr.f32.mxu0 0.0
    %217 = vmatmul.mubr.f32.gmra.mrb[0].mxu0 %v139
    %v218 = vpop.f32.mrb[0].mxu0
    %v219 = vadd.f32 0.0, %v218
    %v220 = vpop.f32.mrb[0].mxu0
    %221 = vmatprep.mubr.f32.mxu0 0.0
    %222 = vmatmul.mubr.f32.gmra.mrb[0].mxu0 %v142
    %v223 = vpop.f32.mrb[0].mxu0
    %v224 = vadd.f32 0.0, %v223
    %v225 = vpop.f32.mrb[0].mxu0
    %226 = vmatprep.mubr.f32.mxu0 0.0
    %227 = vmatmul.mubr.f32.gmra.mrb[0].mxu0 %v145
    %v228 = vpop.f32.mrb[0].mxu0
    %v229 = vadd.f32 0.0, %v228
    %v230 = vpop.f32.mrb[0].mxu0
    %231 = vdwg.mxu0
    %v232 = vadd.f32 %v214, %v219
    %v233 = vadd.f32 %v232, %v224
    %v234 = vadd.f32 %v233, %v229
    %v235 = vrot.slane %v234, 4
    %v236 = vadd.f32 %v234, %v235
    %v237 = vrot.slane %v236, 2
    %v238 = vadd.f32 %v236, %v237
    %v239 = vrot.slane %v238, 1
    %v240 = vadd.f32 %v238, %v239
    %v241 = vmul.f32 %v214, %v214
    %v242 = vmul.f32 %v219, %v219
    %v243 = vmul.f32 %v224, %v224
    %v244 = vmul.f32 %v229, %v229
    %v245 = vadd.f32 %v241, %v242
    %v246 = vadd.f32 %v245, %v243
    %v247 = vadd.f32 %v246, %v244
    %v248 = vrot.slane %v247, 4
    %v249 = vadd.f32 %v247, %v248
    %v250 = vrot.slane %v249, 2
    %v251 = vadd.f32 %v249, %v250
    %v252 = vrot.slane %v251, 1
    %v253 = vadd.f32 %v251, %v252
    %vm254 = vcmask 1040384
    %v255 = vsel %vm254, %v240, %v253
    %v256 = vld [vmem:[%s7] sm:$0xff]
    %v257 = vld [vmem:[%s7 + $0x8] sm:$0xff]
    %v258 = vld [vmem:[%s7 + $0x10] sm:$0xff]
    %v259 = vld [vmem:[%s7 + $0x18] sm:$0xff]
    %v260 = vld [vmem:[%s7 + $0x20] sm:$0xff]
    %v261 = vld [vmem:[%s7 + $0x28] sm:$0xff]
    %v262 = vld [vmem:[%s7 + $0x30] sm:$0xff]
    %v263 = vld [vmem:[%s7 + $0x38] sm:$0xff]
    %v264 = vld [vmem:[%s7 + $0x40] sm:$0xff]
    %v265 = vld [vmem:[%s7 + $0x48] sm:$0xff]
    %v266 = vld [vmem:[%s7 + $0x50] sm:$0xff]
    %v267 = vld [vmem:[%s7 + $0x58] sm:$0xff]
    %v268 = vld [vmem:[%s7 + $0x60] sm:$0xff]
    %v269 = vld [vmem:[%s7 + $0x68] sm:$0xff]
    %v270 = vld [vmem:[%s7 + $0x70] sm:$0xff]
    %v271 = vld [vmem:[%s7 + $0x78] sm:$0xff]
    %272 = vmatprep.subr.mxu0 0.0
    %273 = vmatpush1.msra.mxu0 %v256
    %274 = vmatprep.subr.mxu0 0.0
    %275 = vmatpush1.msra.mxu0 %v257
    %276 = vmatprep.subr.mxu0 0.0
    %277 = vmatpush1.msra.mxu0 %v258
    %278 = vmatprep.subr.mxu0 0.0
    %279 = vmatpush1.msra.mxu0 %v259
    %280 = vmatprep.subr.mxu0 0.0
    %281 = vmatpush1.msra.mxu0 %v260
    %282 = vmatprep.subr.mxu0 0.0
    %283 = vmatpush1.msra.mxu0 %v261
    %284 = vmatprep.subr.mxu0 0.0
    %285 = vmatpush1.msra.mxu0 %v262
    %286 = vmatprep.subr.mxu0 0.0
    %287 = vmatpush1.msra.mxu0 %v263
    %288 = vmatprep.subr.mxu0 0.0
    %289 = vmatpush1.msra.mxu0 %v264
    %290 = vmatprep.subr.mxu0 0.0
    %291 = vmatpush1.msra.mxu0 %v265
    %292 = vmatprep.subr.mxu0 0.0
    %293 = vmatpush1.msra.mxu0 %v266
    %294 = vmatprep.subr.mxu0 0.0
    %295 = vmatpush1.msra.mxu0 %v267
    %296 = vmatprep.subr.mxu0 0.0
    %297 = vmatpush1.msra.mxu0 %v268
    %298 = vmatprep.subr.mxu0 0.0
    %299 = vmatpush1.msra.mxu0 %v269
    %300 = vmatprep.subr.mxu0 0.0
    %301 = vmatpush1.msra.mxu0 %v270
    %302 = vmatprep.subr.mxu0 0.0
    %303 = vmatpush1.msra.mxu0 %v271
    %304 = vmatprep.subr.mxu0 0.0
    %305 = vmatpush1.msra.mxu0 0.0
    %306 = vmatprep.subr.mxu0 0.0
    %307 = vmatpush1.msra.mxu0 0.0
    %308 = vmatprep.subr.mxu0 0.0
    %309 = vmatpush1.msra.mxu0 0.0
    %310 = vmatprep.subr.mxu0 0.0
    %311 = vmatpush1.msra.mxu0 0.0
    %312 = vmatprep.subr.mxu0 0.0
    %313 = vmatpush1.msra.mxu0 0.0
    %314 = vmatprep.subr.mxu0 0.0
    %315 = vmatpush1.msra.mxu0 0.0
    %316 = vmatprep.subr.mxu0 0.0
    %317 = vmatpush1.msra.mxu0 0.0
    %318 = vmatprep.subr.mxu0 0.0
    %319 = vmatpush1.msra.mxu0 0.0
    %320 = vmatprep.subr.mxu0 0.0
    %321 = vmatpush1.msra.mxu0 0.0
    %322 = vmatprep.subr.mxu0 0.0
    %323 = vmatpush1.msra.mxu0 0.0
    %324 = vmatprep.subr.mxu0 0.0
    %325 = vmatpush1.msra.mxu0 0.0
    %326 = vmatprep.subr.mxu0 0.0
    %327 = vmatpush1.msra.mxu0 0.0
    %328 = vmatprep.subr.mxu0 0.0
    %329 = vmatpush1.msra.mxu0 0.0
    %330 = vmatprep.subr.mxu0 0.0
    %331 = vmatpush1.msra.mxu0 0.0
    %332 = vmatprep.subr.mxu0 0.0
    %333 = vmatpush1.msra.mxu0 0.0
    %334 = vmatprep.subr.mxu0 0.0
    %335 = vmatpush1.msra.mxu0 0.0
    %336 = vmatprep.mubr.f32.mxu0 0.0
    %337 = vmatmul.mubr.f32.gmra.mrb[0].mxu0 %v255
    %v338 = vpop.f32.mrb[0].mxu0
    %v339 = vadd.f32 0.0, %v338
    %v340 = vpop.f32.mrb[0].mxu0
    %341 = vdwg.mxu0
    %v342 = vmul.f32 %v339, 0.001953125
    %v343 = vmul.f32 %v342, %v342
    %v345 = vrot.slane %v343, 7
    %v347 = vsub.f32 %v342, %v345
    %v348 = vmax.f32 %v347, 0.0
    %v349 = vadd.f32 %v348, 1e-05
    %v350 = vrsqrt.pop %v349
    %v351 = vld [vmem:[%s6] sm:$0x1]
    %v353 = vrot.slane %v351, 7
    %v355 = vmul.f32 %v350, %v353
    %v356 = vld [vmem:[%s6 + $0x1] sm:$0x1]
    %v358 = vrot.slane %v342, 7
    %v360 = vmul.f32 %v355, %v358
    %v362 = vrot.slane %v360, 1
    %v364 = vsub.f32 %v356, %v362
    %v366 = vrot.slane %v355, 1
    %v369 = vrot.slane %v364, 7
    %v371 = vsel %vm254, %v366, %v369
    %v372 = vld [vmem:[%s8] sm:$0xff]
    %vm373 = vcmask 64512
    %v375 = vsel %vm373, %v371, 0
    %377 = vmatprep.subr.mxu0 0.0
    %378 = vmatpush1.msra.mxu0 %v372
    %379 = vmatprep.subr.mxu0 0.0
    %380 = vmatpush1.msra.mxu0 0.0
    %381 = vmatprep.subr.mxu0 0.0
    %382 = vmatpush1.msra.mxu0 0.0
    %383 = vmatprep.subr.mxu0 0.0
    %384 = vmatpush1.msra.mxu0 0.0
    %385 = vmatprep.subr.mxu0 0.0
    %386 = vmatpush1.msra.mxu0 0.0
    %387 = vmatprep.subr.mxu0 0.0
    %388 = vmatpush1.msra.mxu0 0.0
    %389 = vmatprep.subr.mxu0 0.0
    %390 = vmatpush1.msra.mxu0 0.0
    %391 = vmatprep.subr.mxu0 0.0
    %392 = vmatpush1.msra.mxu0 0.0
    %393 = vmatprep.subr.mxu0 0.0
    %394 = vmatpush1.msra.mxu0 0.0
    %395 = vmatprep.subr.mxu0 0.0
    %396 = vmatpush1.msra.mxu0 0.0
    %397 = vmatprep.subr.mxu0 0.0
    %398 = vmatpush1.msra.mxu0 0.0
    %399 = vmatprep.subr.mxu0 0.0
    %400 = vmatpush1.msra.mxu0 0.0
    %401 = vmatprep.subr.mxu0 0.0
    %402 = vmatpush1.msra.mxu0 0.0
    %403 = vmatprep.subr.mxu0 0.0
    %404 = vmatpush1.msra.mxu0 0.0
    %405 = vmatprep.subr.mxu0 0.0
    %406 = vmatpush1.msra.mxu0 0.0
    %407 = vmatprep.subr.mxu0 0.0
    %408 = vmatpush1.msra.mxu0 0.0
    %409 = vmatprep.subr.mxu0 0.0
    %410 = vmatpush1.msra.mxu0 0.0
    %411 = vmatprep.subr.mxu0 0.0
    %412 = vmatpush1.msra.mxu0 0.0
    %413 = vmatprep.subr.mxu0 0.0
    %414 = vmatpush1.msra.mxu0 0.0
    %415 = vmatprep.subr.mxu0 0.0
    %416 = vmatpush1.msra.mxu0 0.0
    %417 = vmatprep.subr.mxu0 0.0
    %418 = vmatpush1.msra.mxu0 0.0
    %419 = vmatprep.subr.mxu0 0.0
    %420 = vmatpush1.msra.mxu0 0.0
    %421 = vmatprep.subr.mxu0 0.0
    %422 = vmatpush1.msra.mxu0 0.0
    %423 = vmatprep.subr.mxu0 0.0
    %424 = vmatpush1.msra.mxu0 0.0
    %425 = vmatprep.subr.mxu0 0.0
    %426 = vmatpush1.msra.mxu0 0.0
    %427 = vmatprep.subr.mxu0 0.0
    %428 = vmatpush1.msra.mxu0 0.0
    %429 = vmatprep.subr.mxu0 0.0
    %430 = vmatpush1.msra.mxu0 0.0
    %431 = vmatprep.subr.mxu0 0.0
    %432 = vmatpush1.msra.mxu0 0.0
    %433 = vmatprep.subr.mxu0 0.0
    %434 = vmatpush1.msra.mxu0 0.0
    %435 = vmatprep.subr.mxu0 0.0
    %436 = vmatpush1.msra.mxu0 0.0
    %437 = vmatprep.subr.mxu0 0.0
    %438 = vmatpush1.msra.mxu0 0.0
    %439 = vmatprep.subr.mxu0 0.0
    %440 = vmatpush1.msra.mxu0 0.0
    %441 = vmatprep.mubr.f32.mxu0 0.0
    %442 = vmatmul.mubr.f32.gmra.mrb[0].mxu0 %v375
    %v443 = vpop.f32.mrb[0].mxu0
    %v444 = vadd.f32 0.0, %v443
    %v445 = vpop.f32.mrb[0].mxu0
    %446 = vdwg.mxu0
    %v447 = vlaneseq
    %v448 = vshrl.u32 %v447, 7
    %v449 = vsub.s32 0, %v448
    %v450 = vrot.slane %v444, %v449
    %v451 = vmul.f32 %v214, %v450
    %v452 = vmul.f32 %v219, %v450
    %v453 = vmul.f32 %v224, %v450
    %v454 = vmul.f32 %v229, %v450
    %v455 = vlaneseq
    %v456 = vshrl.u32 %v455, 7
    %v457 = vsub.s32 1, %v456
    %v458 = vrot.slane %v444, %v457
    %v459 = vadd.f32 %v451, %v458
    %v460 = vadd.f32 %v452, %v458
    %v461 = vadd.f32 %v453, %v458
    %v462 = vadd.f32 %v454, %v458
    %v463 = vrot.slane %v122, 7
    %v464 = vrot.slane %v123, 7
    %v465 = vrot.slane %v124, 7
    %v466 = vrot.slane %v125, 7
    %vm467 = vcmp.lt.s32.totalorder %v62, 1
    %v468 = vsel %vm467, %v465, %v466
    %v469 = vsel %vm467, %v464, %v465
    %v470 = vsel %vm467, %v463, %v464
    %v471 = vsel %vm467, %v466, %v463
    %v472 = vsel %vm114, 1, 0
    %v473 = vsel %vm115, 1, 0
    %v474 = vsel %vm116, 1, 0
    %v475 = vsel %vm117, 1, 0
    %vm476 = vcmp.eq.s32.totalorder %v472, 1
    %vm477 = vcmp.eq.s32.totalorder %v473, 1
    %vm478 = vcmp.eq.s32.totalorder %v474, 1
    %vm479 = vcmp.eq.s32.totalorder %v475, 1
    %v480 = vsel %vm476, 0.0, %v471
    %v481 = vsel %vm477, 0.0, %v470
    %v482 = vsel %vm478, 0.0, %v469
    %v483 = vsel %vm479, 0.0, %v468
    %v484 = vrot.slane %v122, 1
    %v485 = vrot.slane %v123, 1
    %v486 = vrot.slane %v124, 1
    %v487 = vrot.slane %v125, 1
    %vm488 = vcmp.lt.s32.totalorder %v62, 7
    %v489 = vsel %vm488, %v486, %v487
    %v490 = vsel %vm488, %v485, %v486
    %v491 = vsel %vm488, %v484, %v485
    %v492 = vsel %vm488, %v487, %v484
    %v493 = vsel %vm118, 1, 0
    %v494 = vsel %vm119, 1, 0
    %v495 = vsel %vm120, 1, 0
    %v496 = vsel %vm121, 1, 0
    %vm497 = vcmp.eq.s32.totalorder %v493, 1
    %vm498 = vcmp.eq.s32.totalorder %v494, 1
    %vm499 = vcmp.eq.s32.totalorder %v495, 1
    %vm500 = vcmp.eq.s32.totalorder %v496, 1
    %v501 = vsel %vm497, 0.0, %v491
    %v502 = vsel %vm498, 0.0, %v490
    %v503 = vsel %vm499, 0.0, %v489
    %v504 = vsel %vm500, 0.0, %v492
    %v505 = vld [vmem:[#allocation2] sm:$0xff]
    %v506 = vld [vmem:[#allocation2 + $0x8] sm:$0xff]
    %v507 = vld [vmem:[#allocation2 + $0x10] sm:$0xff]
    %v508 = vld [vmem:[#allocation2 + $0x18] sm:$0xff]
    %v509 = vld [vmem:[#allocation2 + $0x20] sm:$0xff]
    %v510 = vld [vmem:[#allocation2 + $0x28] sm:$0xff]
    %v511 = vld [vmem:[#allocation2 + $0x30] sm:$0xff]
    %v512 = vld [vmem:[#allocation2 + $0x38] sm:$0xff]
    %s513 = scalar_lea.vmem [#allocation2], 64
    %v514 = vld [vmem:[%s513] sm:$0xff]
    %v515 = vld [vmem:[%s513 + $0x8] sm:$0xff]
    %v516 = vld [vmem:[%s513 + $0x10] sm:$0xff]
    %v517 = vld [vmem:[%s513 + $0x18] sm:$0xff]
    %v518 = vld [vmem:[%s513 + $0x20] sm:$0xff]
    %v519 = vld [vmem:[%s513 + $0x28] sm:$0xff]
    %v520 = vld [vmem:[%s513 + $0x30] sm:$0xff]
    %v521 = vld [vmem:[%s513 + $0x38] sm:$0xff]
    %522 = vmatprep.subr.mxu0 0.0
    %523 = vmatpush1.msra.mxu0 %v514
    %524 = vmatprep.subr.mxu0 0.0
    %525 = vmatpush1.msra.mxu0 %v515
    %526 = vmatprep.subr.mxu0 0.0
    %527 = vmatpush1.msra.mxu0 %v516
    %528 = vmatprep.subr.mxu0 0.0
    %529 = vmatpush1.msra.mxu0 %v517
    %530 = vmatprep.subr.mxu0 0.0
    %531 = vmatpush1.msra.mxu0 %v518
    %532 = vmatprep.subr.mxu0 0.0
    %533 = vmatpush1.msra.mxu0 %v519
    %534 = vmatprep.subr.mxu0 0.0
    %535 = vmatpush1.msra.mxu0 %v520
    %536 = vmatprep.subr.mxu0 0.0
    %537 = vmatpush1.msra.mxu0 %v521
    %538 = vmatprep.subr.mxu0 0.0
    %539 = vmatpush1.msra.mxu0 0.0
    %540 = vmatprep.subr.mxu0 0.0
    %541 = vmatpush1.msra.mxu0 0.0
    %542 = vmatprep.subr.mxu0 0.0
    %543 = vmatpush1.msra.mxu0 0.0
    %544 = vmatprep.subr.mxu0 0.0
    %545 = vmatpush1.msra.mxu0 0.0
    %546 = vmatprep.subr.mxu0 0.0
    %547 = vmatpush1.msra.mxu0 0.0
    %548 = vmatprep.subr.mxu0 0.0
    %549 = vmatpush1.msra.mxu0 0.0
    %550 = vmatprep.subr.mxu0 0.0
    %551 = vmatpush1.msra.mxu0 0.0
    %552 = vmatprep.subr.mxu0 0.0
    %553 = vmatpush1.msra.mxu0 0.0
    %554 = vmatprep.subr.mxu0 0.0
    %555 = vmatpush1.msra.mxu0 0.0
    %556 = vmatprep.subr.mxu0 0.0
    %557 = vmatpush1.msra.mxu0 0.0
    %558 = vmatprep.subr.mxu0 0.0
    %559 = vmatpush1.msra.mxu0 0.0
    %560 = vmatprep.subr.mxu0 0.0
    %561 = vmatpush1.msra.mxu0 0.0
    %562 = vmatprep.subr.mxu0 0.0
    %563 = vmatpush1.msra.mxu0 0.0
    %564 = vmatprep.subr.mxu0 0.0
    %565 = vmatpush1.msra.mxu0 0.0
    %566 = vmatprep.subr.mxu0 0.0
    %567 = vmatpush1.msra.mxu0 0.0
    %568 = vmatprep.subr.mxu0 0.0
    %569 = vmatpush1.msra.mxu0 0.0
    %570 = vmatprep.subr.mxu0 0.0
    %571 = vmatpush1.msra.mxu0 0.0
    %572 = vmatprep.subr.mxu0 0.0
    %573 = vmatpush1.msra.mxu0 0.0
    %574 = vmatprep.subr.mxu0 0.0
    %575 = vmatpush1.msra.mxu0 0.0
    %576 = vmatprep.subr.mxu0 0.0
    %577 = vmatpush1.msra.mxu0 0.0
    %578 = vmatprep.subr.mxu0 0.0
    %579 = vmatpush1.msra.mxu0 0.0
    %580 = vmatprep.subr.mxu0 0.0
    %581 = vmatpush1.msra.mxu0 0.0
    %582 = vmatprep.subr.mxu0 0.0
    %583 = vmatpush1.msra.mxu0 0.0
    %584 = vmatprep.subr.mxu0 0.0
    %585 = vmatpush1.msra.mxu0 0.0
    %586 = vmatprep.mubr.f32.mxu0 0.0
    %587 = vmatmul.mubr.f32.gmra.mrb[0].mxu0 %v136
    %v588 = vpop.f32.mrb[0].mxu0
    %v589 = vadd.f32 0.0, %v588
    %v590 = vpop.f32.mrb[0].mxu0
    %591 = vmatprep.mubr.f32.mxu0 0.0
    %592 = vmatmul.mubr.f32.gmra.mrb[0].mxu0 %v139
    %v593 = vpop.f32.mrb[0].mxu0
    %v594 = vadd.f32 0.0, %v593
    %v595 = vpop.f32.mrb[0].mxu0
    %596 = vmatprep.mubr.f32.mxu0 0.0
    %597 = vmatmul.mubr.f32.gmra.mrb[0].mxu0 %v142
    %v598 = vpop.f32.mrb[0].mxu0
    %v599 = vadd.f32 0.0, %v598
    %v600 = vpop.f32.mrb[0].mxu0
    %601 = vmatprep.mubr.f32.mxu0 0.0
    %602 = vmatmul.mubr.f32.gmra.mrb[0].mxu0 %v145
    %v603 = vpop.f32.mrb[0].mxu0
    %v604 = vadd.f32 0.0, %v603
    %v605 = vpop.f32.mrb[0].mxu0
    %606 = vdwg.mxu0
    %v608 = vsel %vm134, %v480, 0
    %v611 = vsel %vm134, %v481, 0
    %v614 = vsel %vm134, %v482, 0
    %v617 = vsel %vm134, %v483, 0
    %619 = vmatprep.subr.mxu0 0.0
    %620 = vmatpush1.msra.mxu0 %v505
    %621 = vmatprep.subr.mxu0 0.0
    %622 = vmatpush1.msra.mxu0 %v506
    %623 = vmatprep.subr.mxu0 0.0
    %624 = vmatpush1.msra.mxu0 %v507
    %625 = vmatprep.subr.mxu0 0.0
    %626 = vmatpush1.msra.mxu0 %v508
    %627 = vmatprep.subr.mxu0 0.0
    %628 = vmatpush1.msra.mxu0 %v509
    %629 = vmatprep.subr.mxu0 0.0
    %630 = vmatpush1.msra.mxu0 %v510
    %631 = vmatprep.subr.mxu0 0.0
    %632 = vmatpush1.msra.mxu0 %v511
    %633 = vmatprep.subr.mxu0 0.0
    %634 = vmatpush1.msra.mxu0 %v512
    %635 = vmatprep.subr.mxu0 0.0
    %636 = vmatpush1.msra.mxu0 0.0
    %637 = vmatprep.subr.mxu0 0.0
    %638 = vmatpush1.msra.mxu0 0.0
    %639 = vmatprep.subr.mxu0 0.0
    %640 = vmatpush1.msra.mxu0 0.0
    %641 = vmatprep.subr.mxu0 0.0
    %642 = vmatpush1.msra.mxu0 0.0
    %643 = vmatprep.subr.mxu0 0.0
    %644 = vmatpush1.msra.mxu0 0.0
    %645 = vmatprep.subr.mxu0 0.0
    %646 = vmatpush1.msra.mxu0 0.0
    %647 = vmatprep.subr.mxu0 0.0
    %648 = vmatpush1.msra.mxu0 0.0
    %649 = vmatprep.subr.mxu0 0.0
    %650 = vmatpush1.msra.mxu0 0.0
    %651 = vmatprep.subr.mxu0 0.0
    %652 = vmatpush1.msra.mxu0 0.0
    %653 = vmatprep.subr.mxu0 0.0
    %654 = vmatpush1.msra.mxu0 0.0
    %655 = vmatprep.subr.mxu0 0.0
    %656 = vmatpush1.msra.mxu0 0.0
    %657 = vmatprep.subr.mxu0 0.0
    %658 = vmatpush1.msra.mxu0 0.0
    %659 = vmatprep.subr.mxu0 0.0
    %660 = vmatpush1.msra.mxu0 0.0
    %661 = vmatprep.subr.mxu0 0.0
    %662 = vmatpush1.msra.mxu0 0.0
    %663 = vmatprep.subr.mxu0 0.0
    %664 = vmatpush1.msra.mxu0 0.0
    %665 = vmatprep.subr.mxu0 0.0
    %666 = vmatpush1.msra.mxu0 0.0
    %667 = vmatprep.subr.mxu0 0.0
    %668 = vmatpush1.msra.mxu0 0.0
    %669 = vmatprep.subr.mxu0 0.0
    %670 = vmatpush1.msra.mxu0 0.0
    %671 = vmatprep.subr.mxu0 0.0
    %672 = vmatpush1.msra.mxu0 0.0
    %673 = vmatprep.subr.mxu0 0.0
    %674 = vmatpush1.msra.mxu0 0.0
    %675 = vmatprep.subr.mxu0 0.0
    %676 = vmatpush1.msra.mxu0 0.0
    %677 = vmatprep.subr.mxu0 0.0
    %678 = vmatpush1.msra.mxu0 0.0
    %679 = vmatprep.subr.mxu0 0.0
    %680 = vmatpush1.msra.mxu0 0.0
    %681 = vmatprep.subr.mxu0 0.0
    %682 = vmatpush1.msra.mxu0 0.0
    %683 = vmatprep.mubr.f32.mxu0 0.0
    %684 = vmatmul.mubr.f32.gmra.mrb[0].mxu0 %v608
    %v685 = vpop.f32.mrb[0].mxu0
    %v686 = vadd.f32 %v589, %v685
    %v687 = vpop.f32.mrb[0].mxu0
    %688 = vmatprep.mubr.f32.mxu0 0.0
    %689 = vmatmul.mubr.f32.gmra.mrb[0].mxu0 %v611
    %v690 = vpop.f32.mrb[0].mxu0
    %v691 = vadd.f32 %v594, %v690
    %v692 = vpop.f32.mrb[0].mxu0
    %693 = vmatprep.mubr.f32.mxu0 0.0
    %694 = vmatmul.mubr.f32.gmra.mrb[0].mxu0 %v614
    %v695 = vpop.f32.mrb[0].mxu0
    %v696 = vadd.f32 %v599, %v695
    %v697 = vpop.f32.mrb[0].mxu0
    %698 = vmatprep.mubr.f32.mxu0 0.0
    %699 = vmatmul.mubr.f32.gmra.mrb[0].mxu0 %v617
    %v700 = vpop.f32.mrb[0].mxu0
    %v701 = vadd.f32 %v604, %v700
    %v702 = vpop.f32.mrb[0].mxu0
    %703 = vdwg.mxu0
    %s704 = scalar_lea.vmem [#allocation2], 128
    %v705 = vld [vmem:[%s704] sm:$0xff]
    %v706 = vld [vmem:[%s704 + $0x8] sm:$0xff]
    %v707 = vld [vmem:[%s704 + $0x10] sm:$0xff]
    %v708 = vld [vmem:[%s704 + $0x18] sm:$0xff]
    %v709 = vld [vmem:[%s704 + $0x20] sm:$0xff]
    %v710 = vld [vmem:[%s704 + $0x28] sm:$0xff]
    %v711 = vld [vmem:[%s704 + $0x30] sm:$0xff]
    %v712 = vld [vmem:[%s704 + $0x38] sm:$0xff]
    %v714 = vsel %vm134, %v501, 0
    %v717 = vsel %vm134, %v502, 0
    %v720 = vsel %vm134, %v503, 0
    %v723 = vsel %vm134, %v504, 0
    %725 = vmatprep.subr.mxu0 0.0
    %726 = vmatpush1.msra.mxu0 %v705
    %727 = vmatprep.subr.mxu0 0.0
    %728 = vmatpush1.msra.mxu0 %v706
    %729 = vmatprep.subr.mxu0 0.0
    %730 = vmatpush1.msra.mxu0 %v707
    %731 = vmatprep.subr.mxu0 0.0
    %732 = vmatpush1.msra.mxu0 %v708
    %733 = vmatprep.subr.mxu0 0.0
    %734 = vmatpush1.msra.mxu0 %v709
    %735 = vmatprep.subr.mxu0 0.0
    %736 = vmatpush1.msra.mxu0 %v710
    %737 = vmatprep.subr.mxu0 0.0
    %738 = vmatpush1.msra.mxu0 %v711
    %739 = vmatprep.subr.mxu0 0.0
    %740 = vmatpush1.msra.mxu0 %v712
    %741 = vmatprep.subr.mxu0 0.0
    %742 = vmatpush1.msra.mxu0 0.0
    %743 = vmatprep.subr.mxu0 0.0
    %744 = vmatpush1.msra.mxu0 0.0
    %745 = vmatprep.subr.mxu0 0.0
    %746 = vmatpush1.msra.mxu0 0.0
    %747 = vmatprep.subr.mxu0 0.0
    %748 = vmatpush1.msra.mxu0 0.0
    %749 = vmatprep.subr.mxu0 0.0
    %750 = vmatpush1.msra.mxu0 0.0
    %751 = vmatprep.subr.mxu0 0.0
    %752 = vmatpush1.msra.mxu0 0.0
    %753 = vmatprep.subr.mxu0 0.0
    %754 = vmatpush1.msra.mxu0 0.0
    %755 = vmatprep.subr.mxu0 0.0
    %756 = vmatpush1.msra.mxu0 0.0
    %757 = vmatprep.subr.mxu0 0.0
    %758 = vmatpush1.msra.mxu0 0.0
    %759 = vmatprep.subr.mxu0 0.0
    %760 = vmatpush1.msra.mxu0 0.0
    %761 = vmatprep.subr.mxu0 0.0
    %762 = vmatpush1.msra.mxu0 0.0
    %763 = vmatprep.subr.mxu0 0.0
    %764 = vmatpush1.msra.mxu0 0.0
    %765 = vmatprep.subr.mxu0 0.0
    %766 = vmatpush1.msra.mxu0 0.0
    %767 = vmatprep.subr.mxu0 0.0
    %768 = vmatpush1.msra.mxu0 0.0
    %769 = vmatprep.subr.mxu0 0.0
    %770 = vmatpush1.msra.mxu0 0.0
    %771 = vmatprep.subr.mxu0 0.0
    %772 = vmatpush1.msra.mxu0 0.0
    %773 = vmatprep.subr.mxu0 0.0
    %774 = vmatpush1.msra.mxu0 0.0
    %775 = vmatprep.subr.mxu0 0.0
    %776 = vmatpush1.msra.mxu0 0.0
    %777 = vmatprep.subr.mxu0 0.0
    %778 = vmatpush1.msra.mxu0 0.0
    %779 = vmatprep.subr.mxu0 0.0
    %780 = vmatpush1.msra.mxu0 0.0
    %781 = vmatprep.subr.mxu0 0.0
    %782 = vmatpush1.msra.mxu0 0.0
    %783 = vmatprep.subr.mxu0 0.0
    %784 = vmatpush1.msra.mxu0 0.0
    %785 = vmatprep.subr.mxu0 0.0
    %786 = vmatpush1.msra.mxu0 0.0
    %787 = vmatprep.subr.mxu0 0.0
    %788 = vmatpush1.msra.mxu0 0.0
    %789 = vmatprep.mubr.f32.mxu0 0.0
    %790 = vmatmul.mubr.f32.gmra.mrb[0].mxu0 %v714
    %v791 = vpop.f32.mrb[0].mxu0
    %v792 = vadd.f32 0.0, %v791
    %v793 = vpop.f32.mrb[0].mxu0
    %794 = vmatprep.mubr.f32.mxu0 0.0
    %795 = vmatmul.mubr.f32.gmra.mrb[0].mxu0 %v717
    %v796 = vpop.f32.mrb[0].mxu0
    %v797 = vadd.f32 0.0, %v796
    %v798 = vpop.f32.mrb[0].mxu0
    %799 = vmatprep.mubr.f32.mxu0 0.0
    %800 = vmatmul.mubr.f32.gmra.mrb[0].mxu0 %v720
    %v801 = vpop.f32.mrb[0].mxu0
    %v802 = vadd.f32 0.0, %v801
    %v803 = vpop.f32.mrb[0].mxu0
    %804 = vmatprep.mubr.f32.mxu0 0.0
    %805 = vmatmul.mubr.f32.gmra.mrb[0].mxu0 %v723
    %v806 = vpop.f32.mrb[0].mxu0
    %v807 = vadd.f32 0.0, %v806
    %v808 = vpop.f32.mrb[0].mxu0
    %809 = vdwg.mxu0
    %v810 = vadd.f32 %v686, %v792
    %v811 = vadd.f32 %v691, %v797
    %v812 = vadd.f32 %v696, %v802
    %v813 = vadd.f32 %v701, %v807
    %v814 = vadd.f32 %v810, %v811
    %v815 = vadd.f32 %v814, %v812
    %v816 = vadd.f32 %v815, %v813
    %v817 = vrot.slane %v816, 4
    %v818 = vadd.f32 %v816, %v817
    %v819 = vrot.slane %v818, 2
    %v820 = vadd.f32 %v818, %v819
    %v821 = vrot.slane %v820, 1
    %v822 = vadd.f32 %v820, %v821
    %v823 = vmul.f32 %v810, %v810
    %v824 = vmul.f32 %v811, %v811
    %v825 = vmul.f32 %v812, %v812
    %v826 = vmul.f32 %v813, %v813
    %v827 = vadd.f32 %v823, %v824
    %v828 = vadd.f32 %v827, %v825
    %v829 = vadd.f32 %v828, %v826
    %v830 = vrot.slane %v829, 4
    %v831 = vadd.f32 %v829, %v830
    %v832 = vrot.slane %v831, 2
    %v833 = vadd.f32 %v831, %v832
    %v834 = vrot.slane %v833, 1
    %v835 = vadd.f32 %v833, %v834
    %v836 = vsel %vm254, %v822, %v835
    %837 = vmatprep.subr.mxu0 0.0
    %838 = vmatpush1.msra.mxu0 %v256
    %839 = vmatprep.subr.mxu0 0.0
    %840 = vmatpush1.msra.mxu0 %v257
    %841 = vmatprep.subr.mxu0 0.0
    %842 = vmatpush1.msra.mxu0 %v258
    %843 = vmatprep.subr.mxu0 0.0
    %844 = vmatpush1.msra.mxu0 %v259
    %845 = vmatprep.subr.mxu0 0.0
    %846 = vmatpush1.msra.mxu0 %v260
    %847 = vmatprep.subr.mxu0 0.0
    %848 = vmatpush1.msra.mxu0 %v261
    %849 = vmatprep.subr.mxu0 0.0
    %850 = vmatpush1.msra.mxu0 %v262
    %851 = vmatprep.subr.mxu0 0.0
    %852 = vmatpush1.msra.mxu0 %v263
    %853 = vmatprep.subr.mxu0 0.0
    %854 = vmatpush1.msra.mxu0 %v264
    %855 = vmatprep.subr.mxu0 0.0
    %856 = vmatpush1.msra.mxu0 %v265
    %857 = vmatprep.subr.mxu0 0.0
    %858 = vmatpush1.msra.mxu0 %v266
    %859 = vmatprep.subr.mxu0 0.0
    %860 = vmatpush1.msra.mxu0 %v267
    %861 = vmatprep.subr.mxu0 0.0
    %862 = vmatpush1.msra.mxu0 %v268
    %863 = vmatprep.subr.mxu0 0.0
    %864 = vmatpush1.msra.mxu0 %v269
    %865 = vmatprep.subr.mxu0 0.0
    %866 = vmatpush1.msra.mxu0 %v270
    %867 = vmatprep.subr.mxu0 0.0
    %868 = vmatpush1.msra.mxu0 %v271
    %869 = vmatprep.subr.mxu0 0.0
    %870 = vmatpush1.msra.mxu0 0.0
    %871 = vmatprep.subr.mxu0 0.0
    %872 = vmatpush1.msra.mxu0 0.0
    %873 = vmatprep.subr.mxu0 0.0
    %874 = vmatpush1.msra.mxu0 0.0
    %875 = vmatprep.subr.mxu0 0.0
    %876 = vmatpush1.msra.mxu0 0.0
    %877 = vmatprep.subr.mxu0 0.0
    %878 = vmatpush1.msra.mxu0 0.0
    %879 = vmatprep.subr.mxu0 0.0
    %880 = vmatpush1.msra.mxu0 0.0
    %881 = vmatprep.subr.mxu0 0.0
    %882 = vmatpush1.msra.mxu0 0.0
    %883 = vmatprep.subr.mxu0 0.0
    %884 = vmatpush1.msra.mxu0 0.0
    %885 = vmatprep.subr.mxu0 0.0
    %886 = vmatpush1.msra.mxu0 0.0
    %887 = vmatprep.subr.mxu0 0.0
    %888 = vmatpush1.msra.mxu0 0.0
    %889 = vmatprep.subr.mxu0 0.0
    %890 = vmatpush1.msra.mxu0 0.0
    %891 = vmatprep.subr.mxu0 0.0
    %892 = vmatpush1.msra.mxu0 0.0
    %893 = vmatprep.subr.mxu0 0.0
    %894 = vmatpush1.msra.mxu0 0.0
    %895 = vmatprep.subr.mxu0 0.0
    %896 = vmatpush1.msra.mxu0 0.0
    %897 = vmatprep.subr.mxu0 0.0
    %898 = vmatpush1.msra.mxu0 0.0
    %899 = vmatprep.subr.mxu0 0.0
    %900 = vmatpush1.msra.mxu0 0.0
    %901 = vmatprep.mubr.f32.mxu0 0.0
    %902 = vmatmul.mubr.f32.gmra.mrb[0].mxu0 %v836
    %v903 = vpop.f32.mrb[0].mxu0
    %v904 = vadd.f32 0.0, %v903
    %v905 = vpop.f32.mrb[0].mxu0
    %906 = vdwg.mxu0
    %v907 = vmul.f32 %v904, 0.001953125
    %v908 = vmul.f32 %v907, %v907
    %v910 = vrot.slane %v908, 7
    %v912 = vsub.f32 %v907, %v910
    %v913 = vmax.f32 %v912, 0.0
    %v914 = vadd.f32 %v913, 1e-05
    %v915 = vrsqrt.pop %v914
    %v916 = vld [vmem:[%s4] sm:$0x1]
    %v918 = vrot.slane %v916, 7
    %v920 = vmul.f32 %v915, %v918
    %v921 = vld [vmem:[%s4 + $0x1] sm:$0x1]
    %v923 = vrot.slane %v907, 7
    %v925 = vmul.f32 %v920, %v923
    %v927 = vrot.slane %v925, 1
    %v929 = vsub.f32 %v921, %v927
    %v931 = vrot.slane %v920, 1
    %v934 = vrot.slane %v929, 7
    %v936 = vsel %vm254, %v931, %v934
    %v938 = vsel %vm373, %v936, 0
    %940 = vmatprep.subr.mxu0 0.0
    %941 = vmatpush1.msra.mxu0 %v372
    %942 = vmatprep.subr.mxu0 0.0
    %943 = vmatpush1.msra.mxu0 0.0
    %944 = vmatprep.subr.mxu0 0.0
    %945 = vmatpush1.msra.mxu0 0.0
    %946 = vmatprep.subr.mxu0 0.0
    %947 = vmatpush1.msra.mxu0 0.0
    %948 = vmatprep.subr.mxu0 0.0
    %949 = vmatpush1.msra.mxu0 0.0
    %950 = vmatprep.subr.mxu0 0.0
    %951 = vmatpush1.msra.mxu0 0.0
    %952 = vmatprep.subr.mxu0 0.0
    %953 = vmatpush1.msra.mxu0 0.0
    %954 = vmatprep.subr.mxu0 0.0
    %955 = vmatpush1.msra.mxu0 0.0
    %956 = vmatprep.subr.mxu0 0.0
    %957 = vmatpush1.msra.mxu0 0.0
    %958 = vmatprep.subr.mxu0 0.0
    %959 = vmatpush1.msra.mxu0 0.0
    %960 = vmatprep.subr.mxu0 0.0
    %961 = vmatpush1.msra.mxu0 0.0
    %962 = vmatprep.subr.mxu0 0.0
    %963 = vmatpush1.msra.mxu0 0.0
    %964 = vmatprep.subr.mxu0 0.0
    %965 = vmatpush1.msra.mxu0 0.0
    %966 = vmatprep.subr.mxu0 0.0
    %967 = vmatpush1.msra.mxu0 0.0
    %968 = vmatprep.subr.mxu0 0.0
    %969 = vmatpush1.msra.mxu0 0.0
    %970 = vmatprep.subr.mxu0 0.0
    %971 = vmatpush1.msra.mxu0 0.0
    %972 = vmatprep.subr.mxu0 0.0
    %973 = vmatpush1.msra.mxu0 0.0
    %974 = vmatprep.subr.mxu0 0.0
    %975 = vmatpush1.msra.mxu0 0.0
    %976 = vmatprep.subr.mxu0 0.0
    %977 = vmatpush1.msra.mxu0 0.0
    %978 = vmatprep.subr.mxu0 0.0
    %979 = vmatpush1.msra.mxu0 0.0
    %980 = vmatprep.subr.mxu0 0.0
    %981 = vmatpush1.msra.mxu0 0.0
    %982 = vmatprep.subr.mxu0 0.0
    %983 = vmatpush1.msra.mxu0 0.0
    %984 = vmatprep.subr.mxu0 0.0
    %985 = vmatpush1.msra.mxu0 0.0
    %986 = vmatprep.subr.mxu0 0.0
    %987 = vmatpush1.msra.mxu0 0.0
    %988 = vmatprep.subr.mxu0 0.0
    %989 = vmatpush1.msra.mxu0 0.0
    %990 = vmatprep.subr.mxu0 0.0
    %991 = vmatpush1.msra.mxu0 0.0
    %992 = vmatprep.subr.mxu0 0.0
    %993 = vmatpush1.msra.mxu0 0.0
    %994 = vmatprep.subr.mxu0 0.0
    %995 = vmatpush1.msra.mxu0 0.0
    %996 = vmatprep.subr.mxu0 0.0
    %997 = vmatpush1.msra.mxu0 0.0
    %998 = vmatprep.subr.mxu0 0.0
    %999 = vmatpush1.msra.mxu0 0.0
    %1000 = vmatprep.subr.mxu0 0.0
    %1001 = vmatpush1.msra.mxu0 0.0
    %1002 = vmatprep.subr.mxu0 0.0
    %1003 = vmatpush1.msra.mxu0 0.0
    %1004 = vmatprep.mubr.f32.mxu0 0.0
    %1005 = vmatmul.mubr.f32.gmra.mrb[0].mxu0 %v938
    %v1006 = vpop.f32.mrb[0].mxu0
    %v1007 = vadd.f32 0.0, %v1006
    %v1008 = vpop.f32.mrb[0].mxu0
    %1009 = vdwg.mxu0
    %v1010 = vlaneseq
    %v1011 = vshrl.u32 %v1010, 7
    %v1012 = vsub.s32 0, %v1011
    %v1013 = vrot.slane %v1007, %v1012
    %v1014 = vmul.f32 %v810, %v1013
    %v1015 = vmul.f32 %v811, %v1013
    %v1016 = vmul.f32 %v812, %v1013
    %v1017 = vmul.f32 %v813, %v1013
    %v1018 = vlaneseq
    %v1019 = vshrl.u32 %v1018, 7
    %v1020 = vsub.s32 1, %v1019
    %v1021 = vrot.slane %v1007, %v1020
    %v1022 = vadd.f32 %v1014, %v1021
    %v1023 = vadd.f32 %v1015, %v1021
    %v1024 = vadd.f32 %v1016, %v1021
    %v1025 = vadd.f32 %v1017, %v1021
    %v1026 = vmax.f32 %v1022, 0.0
    %v1027 = vmax.f32 %v1023, 0.0
    %v1028 = vmax.f32 %v1024, 0.0
    %v1029 = vmax.f32 %v1025, 0.0
    %v1030 = vrot.slane %v1026, 7
    %v1031 = vrot.slane %v1027, 7
    %v1032 = vrot.slane %v1028, 7
    %v1033 = vrot.slane %v1029, 7
    %v1034 = vsel %vm467, %v1032, %v1033
    %v1035 = vsel %vm467, %v1031, %v1032
    %v1036 = vsel %vm467, %v1030, %v1031
    %v1037 = vsel %vm467, %v1033, %v1030
    %v1038 = vsel %vm476, 0.0, %v1037
    %v1039 = vsel %vm477, 0.0, %v1036
    %v1040 = vsel %vm478, 0.0, %v1035
    %v1041 = vsel %vm479, 0.0, %v1034
    %v1042 = vrot.slane %v1026, 1
    %v1043 = vrot.slane %v1027, 1
    %v1044 = vrot.slane %v1028, 1
    %v1045 = vrot.slane %v1029, 1
    %v1046 = vsel %vm488, %v1044, %v1045
    %v1047 = vsel %vm488, %v1043, %v1044
    %v1048 = vsel %vm488, %v1042, %v1043
    %v1049 = vsel %vm488, %v1045, %v1042
    %v1050 = vsel %vm497, 0.0, %v1048
    %v1051 = vsel %vm498, 0.0, %v1047
    %v1052 = vsel %vm499, 0.0, %v1046
    %v1053 = vsel %vm500, 0.0, %v1049
    %v1054 = vld [vmem:[#allocation5] sm:$0xff]
    %v1055 = vld [vmem:[#allocation5 + $0x8] sm:$0xff]
    %v1056 = vld [vmem:[#allocation5 + $0x10] sm:$0xff]
    %v1057 = vld [vmem:[#allocation5 + $0x18] sm:$0xff]
    %v1058 = vld [vmem:[#allocation5 + $0x20] sm:$0xff]
    %v1059 = vld [vmem:[#allocation5 + $0x28] sm:$0xff]
    %v1060 = vld [vmem:[#allocation5 + $0x30] sm:$0xff]
    %v1061 = vld [vmem:[#allocation5 + $0x38] sm:$0xff]
    %v1062 = vld [vmem:[#allocation5 + $0x40] sm:$0xff]
    %v1063 = vld [vmem:[#allocation5 + $0x48] sm:$0xff]
    %v1064 = vld [vmem:[#allocation5 + $0x50] sm:$0xff]
    %v1065 = vld [vmem:[#allocation5 + $0x58] sm:$0xff]
    %v1066 = vld [vmem:[#allocation5 + $0x60] sm:$0xff]
    %v1067 = vld [vmem:[#allocation5 + $0x68] sm:$0xff]
    %v1068 = vld [vmem:[#allocation5 + $0x70] sm:$0xff]
    %v1069 = vld [vmem:[#allocation5 + $0x78] sm:$0xff]
    %s1070 = scalar_lea.vmem [#allocation5], 128
    %v1071 = vld [vmem:[%s1070] sm:$0xff]
    %v1072 = vld [vmem:[%s1070 + $0x8] sm:$0xff]
    %v1073 = vld [vmem:[%s1070 + $0x10] sm:$0xff]
    %v1074 = vld [vmem:[%s1070 + $0x18] sm:$0xff]
    %v1075 = vld [vmem:[%s1070 + $0x20] sm:$0xff]
    %v1076 = vld [vmem:[%s1070 + $0x28] sm:$0xff]
    %v1077 = vld [vmem:[%s1070 + $0x30] sm:$0xff]
    %v1078 = vld [vmem:[%s1070 + $0x38] sm:$0xff]
    %v1079 = vld [vmem:[%s1070 + $0x40] sm:$0xff]
    %v1080 = vld [vmem:[%s1070 + $0x48] sm:$0xff]
    %v1081 = vld [vmem:[%s1070 + $0x50] sm:$0xff]
    %v1082 = vld [vmem:[%s1070 + $0x58] sm:$0xff]
    %v1083 = vld [vmem:[%s1070 + $0x60] sm:$0xff]
    %v1084 = vld [vmem:[%s1070 + $0x68] sm:$0xff]
    %v1085 = vld [vmem:[%s1070 + $0x70] sm:$0xff]
    %v1086 = vld [vmem:[%s1070 + $0x78] sm:$0xff]
    %1087 = vmatprep.subr.mxu0 0.0
    %1088 = vmatpush1.msra.mxu0 %v1071
    %1089 = vmatprep.subr.mxu0 0.0
    %1090 = vmatpush1.msra.mxu0 %v1072
    %1091 = vmatprep.subr.mxu0 0.0
    %1092 = vmatpush1.msra.mxu0 %v1073
    %1093 = vmatprep.subr.mxu0 0.0
    %1094 = vmatpush1.msra.mxu0 %v1074
    %1095 = vmatprep.subr.mxu0 0.0
    %1096 = vmatpush1.msra.mxu0 %v1075
    %1097 = vmatprep.subr.mxu0 0.0
    %1098 = vmatpush1.msra.mxu0 %v1076
    %1099 = vmatprep.subr.mxu0 0.0
    %1100 = vmatpush1.msra.mxu0 %v1077
    %1101 = vmatprep.subr.mxu0 0.0
    %1102 = vmatpush1.msra.mxu0 %v1078
    %1103 = vmatprep.subr.mxu0 0.0
    %1104 = vmatpush1.msra.mxu0 %v1079
    %1105 = vmatprep.subr.mxu0 0.0
    %1106 = vmatpush1.msra.mxu0 %v1080
    %1107 = vmatprep.subr.mxu0 0.0
    %1108 = vmatpush1.msra.mxu0 %v1081
    %1109 = vmatprep.subr.mxu0 0.0
    %1110 = vmatpush1.msra.mxu0 %v1082
    %1111 = vmatprep.subr.mxu0 0.0
    %1112 = vmatpush1.msra.mxu0 %v1083
    %1113 = vmatprep.subr.mxu0 0.0
    %1114 = vmatpush1.msra.mxu0 %v1084
    %1115 = vmatprep.subr.mxu0 0.0
    %1116 = vmatpush1.msra.mxu0 %v1085
    %1117 = vmatprep.subr.mxu0 0.0
    %1118 = vmatpush1.msra.mxu0 %v1086
    %1119 = vmatprep.subr.mxu0 0.0
    %1120 = vmatpush1.msra.mxu0 0.0
    %1121 = vmatprep.subr.mxu0 0.0
    %1122 = vmatpush1.msra.mxu0 0.0
    %1123 = vmatprep.subr.mxu0 0.0
    %1124 = vmatpush1.msra.mxu0 0.0
    %1125 = vmatprep.subr.mxu0 0.0
    %1126 = vmatpush1.msra.mxu0 0.0
    %1127 = vmatprep.subr.mxu0 0.0
    %1128 = vmatpush1.msra.mxu0 0.0
    %1129 = vmatprep.subr.mxu0 0.0
    %1130 = vmatpush1.msra.mxu0 0.0
    %1131 = vmatprep.subr.mxu0 0.0
    %1132 = vmatpush1.msra.mxu0 0.0
    %1133 = vmatprep.subr.mxu0 0.0
    %1134 = vmatpush1.msra.mxu0 0.0
    %1135 = vmatprep.subr.mxu0 0.0
    %1136 = vmatpush1.msra.mxu0 0.0
    %1137 = vmatprep.subr.mxu0 0.0
    %1138 = vmatpush1.msra.mxu0 0.0
    %1139 = vmatprep.subr.mxu0 0.0
    %1140 = vmatpush1.msra.mxu0 0.0
    %1141 = vmatprep.subr.mxu0 0.0
    %1142 = vmatpush1.msra.mxu0 0.0
    %1143 = vmatprep.subr.mxu0 0.0
    %1144 = vmatpush1.msra.mxu0 0.0
    %1145 = vmatprep.subr.mxu0 0.0
    %1146 = vmatpush1.msra.mxu0 0.0
    %1147 = vmatprep.subr.mxu0 0.0
    %1148 = vmatpush1.msra.mxu0 0.0
    %1149 = vmatprep.subr.mxu0 0.0
    %1150 = vmatpush1.msra.mxu0 0.0
    %1151 = vmatprep.mubr.f32.mxu0 0.0
    %1152 = vmatmul.mubr.f32.gmra.mrb[0].mxu0 %v1026
    %v1153 = vpop.f32.mrb[0].mxu0
    %v1154 = vadd.f32 0.0, %v1153
    %v1155 = vpop.f32.mrb[0].mxu0
    %1156 = vmatprep.mubr.f32.mxu0 0.0
    %1157 = vmatmul.mubr.f32.gmra.mrb[0].mxu0 %v1027
    %v1158 = vpop.f32.mrb[0].mxu0
    %v1159 = vadd.f32 0.0, %v1158
    %v1160 = vpop.f32.mrb[0].mxu0
    %1161 = vmatprep.mubr.f32.mxu0 0.0
    %1162 = vmatmul.mubr.f32.gmra.mrb[0].mxu0 %v1028
    %v1163 = vpop.f32.mrb[0].mxu0
    %v1164 = vadd.f32 0.0, %v1163
    %v1165 = vpop.f32.mrb[0].mxu0
    %1166 = vmatprep.mubr.f32.mxu0 0.0
    %1167 = vmatmul.mubr.f32.gmra.mrb[0].mxu0 %v1029
    %v1168 = vpop.f32.mrb[0].mxu0
    %v1169 = vadd.f32 0.0, %v1168
    %v1170 = vpop.f32.mrb[0].mxu0
    %1171 = vdwg.mxu0
    %1172 = vmatprep.subr.mxu0 0.0
    %1173 = vmatpush1.msra.mxu0 %v1054
    %1174 = vmatprep.subr.mxu0 0.0
    %1175 = vmatpush1.msra.mxu0 %v1055
    %1176 = vmatprep.subr.mxu0 0.0
    %1177 = vmatpush1.msra.mxu0 %v1056
    %1178 = vmatprep.subr.mxu0 0.0
    %1179 = vmatpush1.msra.mxu0 %v1057
    %1180 = vmatprep.subr.mxu0 0.0
    %1181 = vmatpush1.msra.mxu0 %v1058
    %1182 = vmatprep.subr.mxu0 0.0
    %1183 = vmatpush1.msra.mxu0 %v1059
    %1184 = vmatprep.subr.mxu0 0.0
    %1185 = vmatpush1.msra.mxu0 %v1060
    %1186 = vmatprep.subr.mxu0 0.0
    %1187 = vmatpush1.msra.mxu0 %v1061
    %1188 = vmatprep.subr.mxu0 0.0
    %1189 = vmatpush1.msra.mxu0 %v1062
    %1190 = vmatprep.subr.mxu0 0.0
    %1191 = vmatpush1.msra.mxu0 %v1063
    %1192 = vmatprep.subr.mxu0 0.0
    %1193 = vmatpush1.msra.mxu0 %v1064
    %1194 = vmatprep.subr.mxu0 0.0
    %1195 = vmatpush1.msra.mxu0 %v1065
    %1196 = vmatprep.subr.mxu0 0.0
    %1197 = vmatpush1.msra.mxu0 %v1066
    %1198 = vmatprep.subr.mxu0 0.0
    %1199 = vmatpush1.msra.mxu0 %v1067
    %1200 = vmatprep.subr.mxu0 0.0
    %1201 = vmatpush1.msra.mxu0 %v1068
    %1202 = vmatprep.subr.mxu0 0.0
    %1203 = vmatpush1.msra.mxu0 %v1069
    %1204 = vmatprep.subr.mxu0 0.0
    %1205 = vmatpush1.msra.mxu0 0.0
    %1206 = vmatprep.subr.mxu0 0.0
    %1207 = vmatpush1.msra.mxu0 0.0
    %1208 = vmatprep.subr.mxu0 0.0
    %1209 = vmatpush1.msra.mxu0 0.0
    %1210 = vmatprep.subr.mxu0 0.0
    %1211 = vmatpush1.msra.mxu0 0.0
    %1212 = vmatprep.subr.mxu0 0.0
    %1213 = vmatpush1.msra.mxu0 0.0
    %1214 = vmatprep.subr.mxu0 0.0
    %1215 = vmatpush1.msra.mxu0 0.0
    %1216 = vmatprep.subr.mxu0 0.0
    %1217 = vmatpush1.msra.mxu0 0.0
    %1218 = vmatprep.subr.mxu0 0.0
    %1219 = vmatpush1.msra.mxu0 0.0
    %1220 = vmatprep.subr.mxu0 0.0
    %1221 = vmatpush1.msra.mxu0 0.0
    %1222 = vmatprep.subr.mxu0 0.0
    %1223 = vmatpush1.msra.mxu0 0.0
    %1224 = vmatprep.subr.mxu0 0.0
    %1225 = vmatpush1.msra.mxu0 0.0
    %1226 = vmatprep.subr.mxu0 0.0
    %1227 = vmatpush1.msra.mxu0 0.0
    %1228 = vmatprep.subr.mxu0 0.0
    %1229 = vmatpush1.msra.mxu0 0.0
    %1230 = vmatprep.subr.mxu0 0.0
    %1231 = vmatpush1.msra.mxu0 0.0
    %1232 = vmatprep.subr.mxu0 0.0
    %1233 = vmatpush1.msra.mxu0 0.0
    %1234 = vmatprep.subr.mxu0 0.0
    %1235 = vmatpush1.msra.mxu0 0.0
    %1236 = vmatprep.mubr.f32.mxu0 0.0
    %1237 = vmatmul.mubr.f32.gmra.mrb[0].mxu0 %v1038
    %v1238 = vpop.f32.mrb[0].mxu0
    %v1239 = vadd.f32 %v1154, %v1238
    %v1240 = vpop.f32.mrb[0].mxu0
    %1241 = vmatprep.mubr.f32.mxu0 0.0
    %1242 = vmatmul.mubr.f32.gmra.mrb[0].mxu0 %v1039
    %v1243 = vpop.f32.mrb[0].mxu0
    %v1244 = vadd.f32 %v1159, %v1243
    %v1245 = vpop.f32.mrb[0].mxu0
    %1246 = vmatprep.mubr.f32.mxu0 0.0
    %1247 = vmatmul.mubr.f32.gmra.mrb[0].mxu0 %v1040
    %v1248 = vpop.f32.mrb[0].mxu0
    %v1249 = vadd.f32 %v1164, %v1248
    %v1250 = vpop.f32.mrb[0].mxu0
    %1251 = vmatprep.mubr.f32.mxu0 0.0
    %1252 = vmatmul.mubr.f32.gmra.mrb[0].mxu0 %v1041
    %v1253 = vpop.f32.mrb[0].mxu0
    %v1254 = vadd.f32 %v1169, %v1253
    %v1255 = vpop.f32.mrb[0].mxu0
    %1256 = vdwg.mxu0
    %s1257 = scalar_lea.vmem [#allocation5], 256
    %v1258 = vld [vmem:[%s1257] sm:$0xff]
    %v1259 = vld [vmem:[%s1257 + $0x8] sm:$0xff]
    %v1260 = vld [vmem:[%s1257 + $0x10] sm:$0xff]
    %v1261 = vld [vmem:[%s1257 + $0x18] sm:$0xff]
    %v1262 = vld [vmem:[%s1257 + $0x20] sm:$0xff]
    %v1263 = vld [vmem:[%s1257 + $0x28] sm:$0xff]
    %v1264 = vld [vmem:[%s1257 + $0x30] sm:$0xff]
    %v1265 = vld [vmem:[%s1257 + $0x38] sm:$0xff]
    %v1266 = vld [vmem:[%s1257 + $0x40] sm:$0xff]
    %v1267 = vld [vmem:[%s1257 + $0x48] sm:$0xff]
    %v1268 = vld [vmem:[%s1257 + $0x50] sm:$0xff]
    %v1269 = vld [vmem:[%s1257 + $0x58] sm:$0xff]
    %v1270 = vld [vmem:[%s1257 + $0x60] sm:$0xff]
    %v1271 = vld [vmem:[%s1257 + $0x68] sm:$0xff]
    %v1272 = vld [vmem:[%s1257 + $0x70] sm:$0xff]
    %v1273 = vld [vmem:[%s1257 + $0x78] sm:$0xff]
    %1274 = vmatprep.subr.mxu0 0.0
    %1275 = vmatpush1.msra.mxu0 %v1258
    %1276 = vmatprep.subr.mxu0 0.0
    %1277 = vmatpush1.msra.mxu0 %v1259
    %1278 = vmatprep.subr.mxu0 0.0
    %1279 = vmatpush1.msra.mxu0 %v1260
    %1280 = vmatprep.subr.mxu0 0.0
    %1281 = vmatpush1.msra.mxu0 %v1261
    %1282 = vmatprep.subr.mxu0 0.0
    %1283 = vmatpush1.msra.mxu0 %v1262
    %1284 = vmatprep.subr.mxu0 0.0
    %1285 = vmatpush1.msra.mxu0 %v1263
    %1286 = vmatprep.subr.mxu0 0.0
    %1287 = vmatpush1.msra.mxu0 %v1264
    %1288 = vmatprep.subr.mxu0 0.0
    %1289 = vmatpush1.msra.mxu0 %v1265
    %1290 = vmatprep.subr.mxu0 0.0
    %1291 = vmatpush1.msra.mxu0 %v1266
    %1292 = vmatprep.subr.mxu0 0.0
    %1293 = vmatpush1.msra.mxu0 %v1267
    %1294 = vmatprep.subr.mxu0 0.0
    %1295 = vmatpush1.msra.mxu0 %v1268
    %1296 = vmatprep.subr.mxu0 0.0
    %1297 = vmatpush1.msra.mxu0 %v1269
    %1298 = vmatprep.subr.mxu0 0.0
    %1299 = vmatpush1.msra.mxu0 %v1270
    %1300 = vmatprep.subr.mxu0 0.0
    %1301 = vmatpush1.msra.mxu0 %v1271
    %1302 = vmatprep.subr.mxu0 0.0
    %1303 = vmatpush1.msra.mxu0 %v1272
    %1304 = vmatprep.subr.mxu0 0.0
    %1305 = vmatpush1.msra.mxu0 %v1273
    %1306 = vmatprep.subr.mxu0 0.0
    %1307 = vmatpush1.msra.mxu0 0.0
    %1308 = vmatprep.subr.mxu0 0.0
    %1309 = vmatpush1.msra.mxu0 0.0
    %1310 = vmatprep.subr.mxu0 0.0
    %1311 = vmatpush1.msra.mxu0 0.0
    %1312 = vmatprep.subr.mxu0 0.0
    %1313 = vmatpush1.msra.mxu0 0.0
    %1314 = vmatprep.subr.mxu0 0.0
    %1315 = vmatpush1.msra.mxu0 0.0
    %1316 = vmatprep.subr.mxu0 0.0
    %1317 = vmatpush1.msra.mxu0 0.0
    %1318 = vmatprep.subr.mxu0 0.0
    %1319 = vmatpush1.msra.mxu0 0.0
    %1320 = vmatprep.subr.mxu0 0.0
    %1321 = vmatpush1.msra.mxu0 0.0
    %1322 = vmatprep.subr.mxu0 0.0
    %1323 = vmatpush1.msra.mxu0 0.0
    %1324 = vmatprep.subr.mxu0 0.0
    %1325 = vmatpush1.msra.mxu0 0.0
    %1326 = vmatprep.subr.mxu0 0.0
    %1327 = vmatpush1.msra.mxu0 0.0
    %1328 = vmatprep.subr.mxu0 0.0
    %1329 = vmatpush1.msra.mxu0 0.0
    %1330 = vmatprep.subr.mxu0 0.0
    %1331 = vmatpush1.msra.mxu0 0.0
    %1332 = vmatprep.subr.mxu0 0.0
    %1333 = vmatpush1.msra.mxu0 0.0
    %1334 = vmatprep.subr.mxu0 0.0
    %1335 = vmatpush1.msra.mxu0 0.0
    %1336 = vmatprep.subr.mxu0 0.0
    %1337 = vmatpush1.msra.mxu0 0.0
    %1338 = vmatprep.mubr.f32.mxu0 0.0
    %1339 = vmatmul.mubr.f32.gmra.mrb[0].mxu0 %v1050
    %v1340 = vpop.f32.mrb[0].mxu0
    %v1341 = vadd.f32 0.0, %v1340
    %v1342 = vpop.f32.mrb[0].mxu0
    %1343 = vmatprep.mubr.f32.mxu0 0.0
    %1344 = vmatmul.mubr.f32.gmra.mrb[0].mxu0 %v1051
    %v1345 = vpop.f32.mrb[0].mxu0
    %v1346 = vadd.f32 0.0, %v1345
    %v1347 = vpop.f32.mrb[0].mxu0
    %1348 = vmatprep.mubr.f32.mxu0 0.0
    %1349 = vmatmul.mubr.f32.gmra.mrb[0].mxu0 %v1052
    %v1350 = vpop.f32.mrb[0].mxu0
    %v1351 = vadd.f32 0.0, %v1350
    %v1352 = vpop.f32.mrb[0].mxu0
    %1353 = vmatprep.mubr.f32.mxu0 0.0
    %1354 = vmatmul.mubr.f32.gmra.mrb[0].mxu0 %v1053
    %v1355 = vpop.f32.mrb[0].mxu0
    %v1356 = vadd.f32 0.0, %v1355
    %v1357 = vpop.f32.mrb[0].mxu0
    %1358 = vdwg.mxu0
    %v1359 = vadd.f32 %v1239, %v1341
    %v1360 = vadd.f32 %v1244, %v1346
    %v1361 = vadd.f32 %v1249, %v1351
    %v1362 = vadd.f32 %v1254, %v1356
    %v1363 = vadd.f32 %v1359, %v1360
    %v1364 = vadd.f32 %v1363, %v1361
    %v1365 = vadd.f32 %v1364, %v1362
    %v1366 = vrot.slane %v1365, 4
    %v1367 = vadd.f32 %v1365, %v1366
    %v1368 = vrot.slane %v1367, 2
    %v1369 = vadd.f32 %v1367, %v1368
    %v1370 = vrot.slane %v1369, 1
    %v1371 = vadd.f32 %v1369, %v1370
    %v1372 = vmul.f32 %v1359, %v1359
    %v1373 = vmul.f32 %v1360, %v1360
    %v1374 = vmul.f32 %v1361, %v1361
    %v1375 = vmul.f32 %v1362, %v1362
    %v1376 = vadd.f32 %v1372, %v1373
    %v1377 = vadd.f32 %v1376, %v1374
    %v1378 = vadd.f32 %v1377, %v1375
    %v1379 = vrot.slane %v1378, 4
    %v1380 = vadd.f32 %v1378, %v1379
    %v1381 = vrot.slane %v1380, 2
    %v1382 = vadd.f32 %v1380, %v1381
    %v1383 = vrot.slane %v1382, 1
    %v1384 = vadd.f32 %v1382, %v1383
    %v1385 = vsel %vm254, %v1371, %v1384
    %1386 = vmatprep.subr.mxu0 0.0
    %1387 = vmatpush1.msra.mxu0 %v256
    %1388 = vmatprep.subr.mxu0 0.0
    %1389 = vmatpush1.msra.mxu0 %v257
    %1390 = vmatprep.subr.mxu0 0.0
    %1391 = vmatpush1.msra.mxu0 %v258
    %1392 = vmatprep.subr.mxu0 0.0
    %1393 = vmatpush1.msra.mxu0 %v259
    %1394 = vmatprep.subr.mxu0 0.0
    %1395 = vmatpush1.msra.mxu0 %v260
    %1396 = vmatprep.subr.mxu0 0.0
    %1397 = vmatpush1.msra.mxu0 %v261
    %1398 = vmatprep.subr.mxu0 0.0
    %1399 = vmatpush1.msra.mxu0 %v262
    %1400 = vmatprep.subr.mxu0 0.0
    %1401 = vmatpush1.msra.mxu0 %v263
    %1402 = vmatprep.subr.mxu0 0.0
    %1403 = vmatpush1.msra.mxu0 %v264
    %1404 = vmatprep.subr.mxu0 0.0
    %1405 = vmatpush1.msra.mxu0 %v265
    %1406 = vmatprep.subr.mxu0 0.0
    %1407 = vmatpush1.msra.mxu0 %v266
    %1408 = vmatprep.subr.mxu0 0.0
    %1409 = vmatpush1.msra.mxu0 %v267
    %1410 = vmatprep.subr.mxu0 0.0
    %1411 = vmatpush1.msra.mxu0 %v268
    %1412 = vmatprep.subr.mxu0 0.0
    %1413 = vmatpush1.msra.mxu0 %v269
    %1414 = vmatprep.subr.mxu0 0.0
    %1415 = vmatpush1.msra.mxu0 %v270
    %1416 = vmatprep.subr.mxu0 0.0
    %1417 = vmatpush1.msra.mxu0 %v271
    %1418 = vmatprep.subr.mxu0 0.0
    %1419 = vmatpush1.msra.mxu0 0.0
    %1420 = vmatprep.subr.mxu0 0.0
    %1421 = vmatpush1.msra.mxu0 0.0
    %1422 = vmatprep.subr.mxu0 0.0
    %1423 = vmatpush1.msra.mxu0 0.0
    %1424 = vmatprep.subr.mxu0 0.0
    %1425 = vmatpush1.msra.mxu0 0.0
    %1426 = vmatprep.subr.mxu0 0.0
    %1427 = vmatpush1.msra.mxu0 0.0
    %1428 = vmatprep.subr.mxu0 0.0
    %1429 = vmatpush1.msra.mxu0 0.0
    %1430 = vmatprep.subr.mxu0 0.0
    %1431 = vmatpush1.msra.mxu0 0.0
    %1432 = vmatprep.subr.mxu0 0.0
    %1433 = vmatpush1.msra.mxu0 0.0
    %1434 = vmatprep.subr.mxu0 0.0
    %1435 = vmatpush1.msra.mxu0 0.0
    %1436 = vmatprep.subr.mxu0 0.0
    %1437 = vmatpush1.msra.mxu0 0.0
    %1438 = vmatprep.subr.mxu0 0.0
    %1439 = vmatpush1.msra.mxu0 0.0
    %1440 = vmatprep.subr.mxu0 0.0
    %1441 = vmatpush1.msra.mxu0 0.0
    %1442 = vmatprep.subr.mxu0 0.0
    %1443 = vmatpush1.msra.mxu0 0.0
    %1444 = vmatprep.subr.mxu0 0.0
    %1445 = vmatpush1.msra.mxu0 0.0
    %1446 = vmatprep.subr.mxu0 0.0
    %1447 = vmatpush1.msra.mxu0 0.0
    %1448 = vmatprep.subr.mxu0 0.0
    %1449 = vmatpush1.msra.mxu0 0.0
    %1450 = vmatprep.mubr.f32.mxu0 0.0
    %1451 = vmatmul.mubr.f32.gmra.mrb[0].mxu0 %v1385
    %v1452 = vpop.f32.mrb[0].mxu0
    %v1453 = vadd.f32 0.0, %v1452
    %v1454 = vpop.f32.mrb[0].mxu0
    %1455 = vdwg.mxu0
    %v1456 = vmul.f32 %v1453, 0.001953125
    %v1457 = vmul.f32 %v1456, %v1456
    %v1459 = vrot.slane %v1457, 7
    %v1461 = vsub.f32 %v1456, %v1459
    %v1462 = vmax.f32 %v1461, 0.0
    %v1463 = vadd.f32 %v1462, 1e-05
    %v1464 = vrsqrt.pop %v1463
    %v1465 = vld [vmem:[%s5] sm:$0x1]
    %v1467 = vrot.slane %v1465, 7
    %v1469 = vmul.f32 %v1464, %v1467
    %v1470 = vld [vmem:[%s5 + $0x1] sm:$0x1]
    %v1472 = vrot.slane %v1456, 7
    %v1474 = vmul.f32 %v1469, %v1472
    %v1476 = vrot.slane %v1474, 1
    %v1478 = vsub.f32 %v1470, %v1476
    %v1480 = vrot.slane %v1469, 1
    %v1483 = vrot.slane %v1478, 7
    %v1485 = vsel %vm254, %v1480, %v1483
    %v1487 = vsel %vm373, %v1485, 0
    %1489 = vmatprep.subr.mxu0 0.0
    %1490 = vmatpush1.msra.mxu0 %v372
    %1491 = vmatprep.subr.mxu0 0.0
    %1492 = vmatpush1.msra.mxu0 0.0
    %1493 = vmatprep.subr.mxu0 0.0
    %1494 = vmatpush1.msra.mxu0 0.0
    %1495 = vmatprep.subr.mxu0 0.0
    %1496 = vmatpush1.msra.mxu0 0.0
    %1497 = vmatprep.subr.mxu0 0.0
    %1498 = vmatpush1.msra.mxu0 0.0
    %1499 = vmatprep.subr.mxu0 0.0
    %1500 = vmatpush1.msra.mxu0 0.0
    %1501 = vmatprep.subr.mxu0 0.0
    %1502 = vmatpush1.msra.mxu0 0.0
    %1503 = vmatprep.subr.mxu0 0.0
    %1504 = vmatpush1.msra.mxu0 0.0
    %1505 = vmatprep.subr.mxu0 0.0
    %1506 = vmatpush1.msra.mxu0 0.0
    %1507 = vmatprep.subr.mxu0 0.0
    %1508 = vmatpush1.msra.mxu0 0.0
    %1509 = vmatprep.subr.mxu0 0.0
    %1510 = vmatpush1.msra.mxu0 0.0
    %1511 = vmatprep.subr.mxu0 0.0
    %1512 = vmatpush1.msra.mxu0 0.0
    %1513 = vmatprep.subr.mxu0 0.0
    %1514 = vmatpush1.msra.mxu0 0.0
    %1515 = vmatprep.subr.mxu0 0.0
    %1516 = vmatpush1.msra.mxu0 0.0
    %1517 = vmatprep.subr.mxu0 0.0
    %1518 = vmatpush1.msra.mxu0 0.0
    %1519 = vmatprep.subr.mxu0 0.0
    %1520 = vmatpush1.msra.mxu0 0.0
    %1521 = vmatprep.subr.mxu0 0.0
    %1522 = vmatpush1.msra.mxu0 0.0
    %1523 = vmatprep.subr.mxu0 0.0
    %1524 = vmatpush1.msra.mxu0 0.0
    %1525 = vmatprep.subr.mxu0 0.0
    %1526 = vmatpush1.msra.mxu0 0.0
    %1527 = vmatprep.subr.mxu0 0.0
    %1528 = vmatpush1.msra.mxu0 0.0
    %1529 = vmatprep.subr.mxu0 0.0
    %1530 = vmatpush1.msra.mxu0 0.0
    %1531 = vmatprep.subr.mxu0 0.0
    %1532 = vmatpush1.msra.mxu0 0.0
    %1533 = vmatprep.subr.mxu0 0.0
    %1534 = vmatpush1.msra.mxu0 0.0
    %1535 = vmatprep.subr.mxu0 0.0
    %1536 = vmatpush1.msra.mxu0 0.0
    %1537 = vmatprep.subr.mxu0 0.0
    %1538 = vmatpush1.msra.mxu0 0.0
    %1539 = vmatprep.subr.mxu0 0.0
    %1540 = vmatpush1.msra.mxu0 0.0
    %1541 = vmatprep.subr.mxu0 0.0
    %1542 = vmatpush1.msra.mxu0 0.0
    %1543 = vmatprep.subr.mxu0 0.0
    %1544 = vmatpush1.msra.mxu0 0.0
    %1545 = vmatprep.subr.mxu0 0.0
    %1546 = vmatpush1.msra.mxu0 0.0
    %1547 = vmatprep.subr.mxu0 0.0
    %1548 = vmatpush1.msra.mxu0 0.0
    %1549 = vmatprep.subr.mxu0 0.0
    %1550 = vmatpush1.msra.mxu0 0.0
    %1551 = vmatprep.subr.mxu0 0.0
    %1552 = vmatpush1.msra.mxu0 0.0
    %1553 = vmatprep.mubr.f32.mxu0 0.0
    %1554 = vmatmul.mubr.f32.gmra.mrb[0].mxu0 %v1487
    %v1555 = vpop.f32.mrb[0].mxu0
    %v1556 = vadd.f32 0.0, %v1555
    %v1557 = vpop.f32.mrb[0].mxu0
    %1558 = vdwg.mxu0
    %v1559 = vlaneseq
    %v1560 = vshrl.u32 %v1559, 7
    %v1561 = vsub.s32 0, %v1560
    %v1562 = vrot.slane %v1556, %v1561
    %v1563 = vmul.f32 %v1359, %v1562
    %v1564 = vmul.f32 %v1360, %v1562
    %v1565 = vmul.f32 %v1361, %v1562
    %v1566 = vmul.f32 %v1362, %v1562
    %v1567 = vlaneseq
    %v1568 = vshrl.u32 %v1567, 7
    %v1569 = vsub.s32 1, %v1568
    %v1570 = vrot.slane %v1556, %v1569
    %v1571 = vadd.f32 %v1563, %v1570
    %v1572 = vadd.f32 %v1564, %v1570
    %v1573 = vadd.f32 %v1565, %v1570
    %v1574 = vadd.f32 %v1566, %v1570
    %v1575 = vadd.f32 %v1571, %v459
    %v1576 = vadd.f32 %v1572, %v460
    %v1577 = vadd.f32 %v1573, %v461
    %v1578 = vadd.f32 %v1574, %v462
    %v1579 = vmax.f32 %v1575, 0.0
    %v1580 = vmax.f32 %v1576, 0.0
    %v1581 = vmax.f32 %v1577, 0.0
    %v1582 = vmax.f32 %v1578, 0.0
    %1583 = vst [vmem:[#allocation7] sm:$0xff] %v1579
    %1584 = vst [vmem:[#allocation7 + $0x8] sm:$0xff] %v1580
    %1585 = vst [vmem:[#allocation7 + $0x10] sm:$0xff] %v1581
    %1586 = vst [vmem:[#allocation7 + $0x18] sm:$0xff] %v1582
    // Predicated region
    $region46: #{tpu_custom_call.1} parent=1 // pred_check
      _
    $region47: #{tpu_custom_call.1} parent=1 // pred_check_branch
      %1588 = sbr.rel (0) target = $region49
    $region48: #{tpu_custom_call.1} parent=1 // pred_region
      %s1590 = ssub.s32 512, 512
      %1591 = vsyncadd [#allocation4], %s1590
      %s1592 = sshll.u32 [#allocation7], 4
      %s1593 = int_to_ptr.vmem [resolvable:$true] %s1592
      %1598 = dma.vmem_to_hbm [thread:$0]  %s1593, 512, %s9, [#allocation4], 128, 128, 8
    $region49: #{tpu_custom_call.1} parent=1 // pred_fallthru
      _
    // Predicated region
    $region50: #{tpu_custom_call.1} parent=1 // pred_check
      _
    $region51: #{tpu_custom_call.1} parent=1 // pred_check_branch
      %1600 = sbr.rel (0) target = $region53
    $region52: #{tpu_custom_call.1} parent=1 // pred_region
      %1601 = dma.done [#allocation4], 512
    $region53: #{tpu_custom_call.1} parent=1 // pred_fallthru
      _
    %1602 = vsyncpa [#allocation3], 1
    %1603 = vsyncpa [#allocation6], 1
    %1604 = vsyncpa [#allocation4], 1

</llo_original>
